<compile_context>
chip_gen: v5e
topology: v5e:2x2
jax: 0.10.0
libtpu: 0.0.40
codegen_flags: <defaults>
</compile_context>

<pallas_src>
import functools
import math

import jax
import jax.numpy as jnp
from jax import lax
from jax.experimental import pallas as pl
from jax.experimental.pallas import tpu as pltpu


# --------------------------------------------------------------------------
# Single fused encoder kernel (one grid step per batch element)
# --------------------------------------------------------------------------
def _encoder_kernel(x_ref, pm_ref, w_in_ref, b_in_ref,
                    w_ff_ref, b_ff_ref, w_qkv_ref, b_qkv_ref,
                    w_o_ref, b_o_ref, w_1x1_ref, b_1x1_ref,
                    w_out_ref, b_out_ref,
                    out_ref, feat_ref,
                    *, dilations, cq, cv, alpha, compute_dtype):
    C = w_in_ref.shape[0]
    L = x_ref.shape[-1]

    def mm(w, z):
        # MXU matmul in `compute_dtype` (bf16 fast path on v6e/v7x), f32 accum.
        return jnp.dot(w, z.astype(compute_dtype),
                       preferred_element_type=jnp.float32)

    pm = pm_ref[0]                                    # (1, L) padding-mask row
    logpm = jnp.log(pm + 1e-6)                        # hoisted: once per batch
    inv_sqrt_cq = 1.0 / math.sqrt(cq)

    # Encoder.conv_1x1 stem (the reference module applies no mask here)
    feat = mm(w_in_ref[...], x_ref[0]) + b_in_ref[...]            # (C, L) f32

    # num_layers is small & static -> unrolled Python loop; `feat` stays
    # resident in vregs/VMEM for the whole encoder.
    for l, d in enumerate(dilations):
        # --- ConvFeedForward: dilated 3-tap conv + ReLU as ONE matmul on
        #     [x(t-d); x(t); x(t+d)] concatenated along channels (in-kernel
        #     zero-fill shifts, no HBM pad).
        zpad = jnp.zeros((C, d), jnp.float32)
        x_prev = jnp.concatenate([zpad, feat[:, :L - d]], axis=1)   # x[t-d]
        x_next = jnp.concatenate([feat[:, d:], zpad], axis=1)       # x[t+d]
        xcat = jnp.concatenate([x_prev, feat, x_next], axis=0)      # (3C, L)
        ff = jnp.maximum(mm(w_ff_ref[l], xcat) + b_ff_ref[l], 0.0)  # (C, L)

        # --- InstanceNorm1d (affine=False, eps=1e-5, biased var), f32 stats
        mean = jnp.mean(ff, axis=-1, keepdims=True)
        var = jnp.mean(jnp.square(ff - mean), axis=-1, keepdims=True)
        xn = (ff - mean) * lax.rsqrt(var + 1e-5)

        # --- fused q/k/v projection: single (2Cq+Cv, C) x (C, L) matmul
        qkv = mm(w_qkv_ref[l], xn) + b_qkv_ref[l]                   # (2Cq+Cv, L)
        q = qkv[0:cq]
        k = qkv[cq:2 * cq]
        v = qkv[2 * cq:2 * cq + cv]

        # --- scalar-dot attention ('normal_att'); softmax kept in f32
        energy = lax.dot_general(q.astype(compute_dtype), k.astype(compute_dtype),
                                 (((0,), (0,)), ((), ())),
                                 preferred_element_type=jnp.float32)   # (L, L)
        logits = energy * inv_sqrt_cq + logpm
        logits = logits - jnp.max(logits, axis=-1, keepdims=True)
        e = jnp.exp(logits)
        att = e * pl.reciprocal(jnp.sum(e, axis=-1, keepdims=True), approx=True)
        att = att * pm
        # out[c, i] = sum_j v[c, j] * att[i, j]  (== bmm(v, att^T))
        outv = lax.dot_general(v.astype(compute_dtype), att.astype(compute_dtype),
                               (((1,), (1,)), ((), ())),
                               preferred_element_type=jnp.float32)     # (Cv, L)
        o = (mm(w_o_ref[l], jnp.maximum(outv, 0.0)) + b_o_ref[l]) * pm

        # --- alpha * attention + ff, trailing 1x1 conv, residual, mask
        mid = alpha * o + ff
        feat = (feat + mm(w_1x1_ref[l], mid) + b_1x1_ref[l]) * pm

    feat_ref[0] = feat
    out_ref[0] = (mm(w_out_ref[...], feat) + b_out_ref[...]) * pm


# --------------------------------------------------------------------------
# Wrapper: packs weights once (fused QKV, flattened 3-tap conv) and launches
# a single pallas_call over the batch.
# --------------------------------------------------------------------------
def encoder_forward(params, x, mask, alpha, *, use_bf16=True):
    B, C_in, L = x.shape
    C = params["w_in"].shape[0]
    NC = params["w_out"].shape[0]
    NL = len(params["layers"])
    Cq = params["layers"][0]["w_q"].shape[0]
    Cv = params["layers"][0]["w_v"].shape[0]
    dilations = tuple(int(lp["dilation"]) for lp in params["layers"])

    wdt = jnp.bfloat16 if use_bf16 else jnp.float32
    pm = mask[:, 0:1, :].astype(jnp.float32)

    # --- parameter packing (done once per call here; in practice cache it) ---
    w_in = params["w_in"].astype(wdt)
    b_in = params["b_in"].reshape(C, 1)
    w_out = params["w_out"].astype(wdt)
    b_out = params["b_out"].reshape(NC, 1)

    w_ff = jnp.stack([lp["w_ff"] for lp in params["layers"]])        # (NL,3,C,C)
    w_ff = jnp.transpose(w_ff, (0, 2, 1, 3)).reshape(NL, C, 3 * C).astype(wdt)
    b_ff = jnp.stack([lp["b_ff"] for lp in params["layers"]]).reshape(NL, C, 1)
    w_qkv = jnp.stack([jnp.concatenate([lp["w_q"], lp["w_k"], lp["w_v"]], axis=0)
                       for lp in params["layers"]]).astype(wdt)      # (NL,2Cq+Cv,C)
    b_qkv = jnp.stack([jnp.concatenate([lp["b_q"], lp["b_k"], lp["b_v"]], axis=0)
                       for lp in params["layers"]]).reshape(NL, 2 * Cq + Cv, 1)
    w_o = jnp.stack([lp["w_o"] for lp in params["layers"]]).astype(wdt)
    b_o = jnp.stack([lp["b_o"] for lp in params["layers"]]).reshape(NL, C, 1)
    w_1x1 = jnp.stack([lp["w_1x1"] for lp in params["layers"]]).astype(wdt)
    b_1x1 = jnp.stack([lp["b_1x1"] for lp in params["layers"]]).reshape(NL, C, 1)

    kern = functools.partial(_encoder_kernel, dilations=dilations, cq=Cq, cv=Cv,
                             alpha=float(alpha), compute_dtype=wdt)

    def wspec(shape):
        return pl.BlockSpec(shape, lambda b, n=len(shape): (0,) * n)

    out, feature = pl.pallas_call(
        kern,
        out_shape=(jax.ShapeDtypeStruct((B, NC, L), jnp.float32),
                   jax.ShapeDtypeStruct((B, C, L), jnp.float32)),
        grid=(B,),
        in_specs=[
            pl.BlockSpec((1, C_in, L), lambda b: (b, 0, 0)),
            pl.BlockSpec((1, 1, L), lambda b: (b, 0, 0)),
            wspec((C, C_in)), wspec((C, 1)),
            wspec((NL, C, 3 * C)), wspec((NL, C, 1)),
            wspec((NL, 2 * Cq + Cv, C)), wspec((NL, 2 * Cq + Cv, 1)),
            wspec((NL, C, Cv)), wspec((NL, C, 1)),
            wspec((NL, C, C)), wspec((NL, C, 1)),
            wspec((NC, C)), wspec((NC, 1)),
        ],
        out_specs=(pl.BlockSpec((1, NC, L), lambda b: (b, 0, 0)),
                   pl.BlockSpec((1, C, L), lambda b: (b, 0, 0))),
        compiler_params=pltpu.CompilerParams(
            dimension_semantics=("parallel",)),   # lets v7x shard B over 2 TCs
    )(x, pm, w_in, b_in, w_ff, b_ff, w_qkv, b_qkv, w_o, b_o, w_1x1, b_1x1,
      w_out, b_out)
    return out, feature


# --------------------------------------------------------------------------
# Pure-JAX f32 reference (same math) for validation
# --------------------------------------------------------------------------
def encoder_reference(params, x, mask, alpha):
    def c1x1(z, w, b):
        return jnp.einsum("oc,bcl->bol", w, z) + b[None, :, None]

    pm = mask[:, 0:1, :]
    feature = c1x1(x, params["w_in"], params["b_in"])
    for lp in params["layers"]:
        d = lp["dilation"]
        L = feature.shape[-1]
        xp = jnp.pad(feature, ((0, 0), (0, 0), (d, d)))
        w = lp["w_ff"]
        ff = (jnp.einsum("oc,bcl->bol", w[0], xp[:, :, 0:L]) +
              jnp.einsum("oc,bcl->bol", w[1], xp[:, :, d:d + L]) +
              jnp.einsum("oc,bcl->bol", w[2], xp[:, :, 2 * d:2 * d + L]) +
              lp["b_ff"][None, :, None])
        ff = jnp.maximum(ff, 0.0)
        mean = jnp.mean(ff, axis=-1, keepdims=True)
        var = jnp.mean((ff - mean) ** 2, axis=-1, keepdims=True)
        xn = (ff - mean) / jnp.sqrt(var + 1e-5)
        q = c1x1(xn, lp["w_q"], lp["b_q"])
        k = c1x1(xn, lp["w_k"], lp["b_k"])
        v = c1x1(xn, lp["w_v"], lp["b_v"])
        energy = jnp.einsum("bcl,bcm->blm", q, k) / math.sqrt(q.shape[1])
        att = jax.nn.softmax(energy + jnp.log(pm + 1e-6), axis=-1) * pm
        outv = jnp.einsum("bcj,bij->bci", v, att)
        o = c1x1(jnp.maximum(outv, 0.0), lp["w_o"], lp["b_o"]) * pm
        mid = alpha * o + ff
        feature = (feature + c1x1(mid, lp["w_1x1"], lp["b_1x1"])) * pm
    out = c1x1(feature, params["w_out"], params["b_out"]) * pm
    return out, feature


# --------------------------------------------------------------------------
# Deterministic parameter init (shapes from Encoder.__init__)
# --------------------------------------------------------------------------
def init_params(key, num_layers, r1, r2, num_f_maps, input_dim, num_classes):
    def conv_w(k, co, ci, ks=None):
        fan_in = ci * (1 if ks is None else ks)
        shape = (co, ci) if ks is None else (ks, co, ci)
        return jax.random.normal(k, shape, jnp.float32) / math.sqrt(fan_in)

    C = num_f_maps
    keys = iter(jax.random.split(key, 8 + 16 * num_layers))
    params = {
        "w_in": conv_w(next(keys), C, input_dim),
        "b_in": 0.01 * jax.random.normal(next(keys), (C,), jnp.float32),
        "w_out": conv_w(next(keys), num_classes, C),
        "b_out": 0.01 * jax.random.normal(next(keys), (num_classes,), jnp.float32),
        "layers": [],
    }
    for i in range(num_layers):
        Cq, Cv = C // r1, C // r2
        lp = {
            "dilation": 2 ** i,
            "w_ff": conv_w(next(keys), C, C, ks=3),
            "b_ff": 0.01 * jax.random.normal(next(keys), (C,), jnp.float32),
            "w_q": conv_w(next(keys), Cq, C),
            "b_q": 0.01 * jax.random.normal(next(keys), (Cq,), jnp.float32),
            "w_k": conv_w(next(keys), Cq, C),
            "b_k": 0.01 * jax.random.normal(next(keys), (Cq,), jnp.float32),
            "w_v": conv_w(next(keys), Cv, C),
            "b_v": 0.01 * jax.random.normal(next(keys), (Cv,), jnp.float32),
            "w_o": conv_w(next(keys), C, Cv),
            "b_o": 0.01 * jax.random.normal(next(keys), (C,), jnp.float32),
            "w_1x1": conv_w(next(keys), C, C),
            "b_1x1": 0.01 * jax.random.normal(next(keys), (C,), jnp.float32),
        }
        params["layers"].append(lp)
    return params


if __name__ == "__main__":
    # Encoder hyper-params (small, consistent with the module)
    num_layers, r1, r2 = 2, 2, 2
    num_f_maps, input_dim, num_classes = 32, 16, 8
    alpha = 1.0
    B, L = 2, 128   # L chosen as a multiple of 128 -> lane-dense loads/stores

    key = jax.random.PRNGKey(0)
    kp, kx = jax.random.split(key)
    params = init_params(kp, num_layers, r1, r2, num_f_maps, input_dim, num_classes)

    x = jax.random.normal(kx, (B, input_dim, L), jnp.float32)
    # mask: (B, 1, L) with ragged valid lengths (L and 96)
    mask = jnp.concatenate(
        [jnp.ones((1, 1, L), jnp.float32),
         jnp.concatenate([jnp.ones((1, 1, 96), jnp.float32),
                          jnp.zeros((1, 1, L - 96), jnp.float32)], axis=-1)],
        axis=0)

    # Fast path: bf16 matmuls, f32 accumulation / IN / softmax.
    out, feature = encoder_forward(params, x, mask, alpha, use_bf16=True)
    jax.block_until_ready((out, feature))

    out_ref, feat_ref = encoder_reference(params, x, mask, alpha)
    assert out.shape == (B, num_classes, L) and feature.shape == (B, num_f_maps, L)
    # bf16 matmuls vs. pure-f32 reference -> loose tolerance
    assert jnp.allclose(out, out_ref, atol=1e-1, rtol=1e-1)
    assert jnp.allclose(feature, feat_ref, atol=1e-1, rtol=1e-1)

    # Strict validation of the fused kernel math with f32 matmuls.
    out32, feat32 = encoder_forward(params, x, mask, alpha, use_bf16=False)
    jax.block_until_ready((out32, feat32))
    assert jnp.allclose(out32, out_ref, atol=2e-2, rtol=2e-2)
    assert jnp.allclose(feat32, feat_ref, atol=2e-2, rtol=2e-2)

    print("KERNEL_OK")
</pallas_src>

<mosaic_0001>
module attributes {stable_mosaic.version = 11 : i64} {
  func.func @_encoder_kernel(%arg0: i32, %arg1: memref<1x16x128xf32, #tpu.memory_space<vmem>>, %arg2: memref<1x1x128xf32, #tpu.memory_space<vmem>>, %arg3: memref<32x16xbf16, #tpu.memory_space<vmem>>, %arg4: memref<32x1xf32, #tpu.memory_space<vmem>>, %arg5: memref<2x32x96xbf16, #tpu.memory_space<vmem>>, %arg6: memref<2x32x1xf32, #tpu.memory_space<vmem>>, %arg7: memref<2x48x32xbf16, #tpu.memory_space<vmem>>, %arg8: memref<2x48x1xf32, #tpu.memory_space<vmem>>, %arg9: memref<2x32x16xbf16, #tpu.memory_space<vmem>>, %arg10: memref<2x32x1xf32, #tpu.memory_space<vmem>>, %arg11: memref<2x32x32xbf16, #tpu.memory_space<vmem>>, %arg12: memref<2x32x1xf32, #tpu.memory_space<vmem>>, %arg13: memref<8x32xbf16, #tpu.memory_space<vmem>>, %arg14: memref<8x1xf32, #tpu.memory_space<vmem>>, %arg15: memref<1x8x128xf32, #tpu.memory_space<vmem>>, %arg16: memref<1x32x128xf32, #tpu.memory_space<vmem>>) attributes {dimension_semantics = [#tpu.dimension_semantics<parallel>], iteration_bounds = array<i64: 2>, scalar_prefetch = 0 : i64, scratch_operands = 0 : i64, tpu.core_type = #tpu.core_type<tc>, window_params = [{transform_indices = @transform_0, window_bounds = array<i64: 1, 16, 128>}, {transform_indices = @transform_1, window_bounds = array<i64: 1, 1, 128>}, {pipeline_mode = #tpu.pipeline_mode<synchronous>, transform_indices = @transform_2, window_bounds = array<i64: 32, 16>}, {pipeline_mode = #tpu.pipeline_mode<synchronous>, transform_indices = @transform_3, window_bounds = array<i64: 32, 1>}, {pipeline_mode = #tpu.pipeline_mode<synchronous>, transform_indices = @transform_4, window_bounds = array<i64: 2, 32, 96>}, {pipeline_mode = #tpu.pipeline_mode<synchronous>, transform_indices = @transform_5, window_bounds = array<i64: 2, 32, 1>}, {pipeline_mode = #tpu.pipeline_mode<synchronous>, transform_indices = @transform_6, window_bounds = array<i64: 2, 48, 32>}, {pipeline_mode = #tpu.pipeline_mode<synchronous>, transform_indices = @transform_7, window_bounds = array<i64: 2, 48, 1>}, {pipeline_mode = #tpu.pipeline_mode<synchronous>, transform_indices = @transform_8, window_bounds = array<i64: 2, 32, 16>}, {pipeline_mode = #tpu.pipeline_mode<synchronous>, transform_indices = @transform_9, window_bounds = array<i64: 2, 32, 1>}, {pipeline_mode = #tpu.pipeline_mode<synchronous>, transform_indices = @transform_10, window_bounds = array<i64: 2, 32, 32>}, {pipeline_mode = #tpu.pipeline_mode<synchronous>, transform_indices = @transform_11, window_bounds = array<i64: 2, 32, 1>}, {pipeline_mode = #tpu.pipeline_mode<synchronous>, transform_indices = @transform_12, window_bounds = array<i64: 8, 32>}, {pipeline_mode = #tpu.pipeline_mode<synchronous>, transform_indices = @transform_13, window_bounds = array<i64: 8, 1>}, {transform_indices = @transform_14, window_bounds = array<i64: 1, 8, 128>}, {transform_indices = @transform_15, window_bounds = array<i64: 1, 32, 128>}]} {
    %c0 = arith.constant 0 : index
    %c0_0 = arith.constant 0 : index
    %c0_1 = arith.constant 0 : index
    %0 = vector.load %arg2[%c0, %c0_0, %c0_1] : memref<1x1x128xf32, #tpu.memory_space<vmem>>, vector<1x1x128xf32>
    %1 = vector.shape_cast %0 : vector<1x1x128xf32> to vector<1x128xf32>
    %cst = arith.constant 9.99999997E-7 : f32
    %2 = vector.broadcast %cst : f32 to vector<1x128xf32>
    %3 = arith.addf %1, %2 : vector<1x128xf32>
    %4 = math.log %3 : vector<1x128xf32>
    %c0_2 = arith.constant 0 : index
    %c0_3 = arith.constant 0 : index
    %5 = vector.load %arg3[%c0_2, %c0_3] : memref<32x16xbf16, #tpu.memory_space<vmem>>, vector<32x16xbf16>
    %c0_4 = arith.constant 0 : index
    %c0_5 = arith.constant 0 : index
    %c0_6 = arith.constant 0 : index
    %6 = vector.load %arg1[%c0_4, %c0_5, %c0_6] : memref<1x16x128xf32, #tpu.memory_space<vmem>>, vector<1x16x128xf32>
    %7 = vector.shape_cast %6 : vector<1x16x128xf32> to vector<16x128xf32>
    %8 = arith.truncf %7 : vector<16x128xf32> to vector<16x128xbf16>
    %cst_7 = arith.constant dense<0.000000e+00> : vector<32x128xf32>
    %9 = tpu.matmul %5, %8, %cst_7 {dimension_numbers = #tpu.dot_dimension_numbers<[1], [0], [0], [1], [0, 0, 1, 1], [], []>} : vector<32x16xbf16>, vector<16x128xbf16>, vector<32x128xf32> -> vector<32x128xf32>
    %c0_8 = arith.constant 0 : index
    %c0_9 = arith.constant 0 : index
    %10 = vector.load %arg4[%c0_8, %c0_9] : memref<32x1xf32, #tpu.memory_space<vmem>>, vector<32x1xf32>
    %11 = vector.broadcast %10 : vector<32x1xf32> to vector<32x128xf32>
    %12 = arith.addf %9, %11 : vector<32x128xf32>
    %cst_10 = arith.constant 0.000000e+00 : f32
    %13 = vector.broadcast %cst_10 : f32 to vector<32x1xf32>
    %14 = vector.extract_strided_slice %12 {offsets = [0, 0], sizes = [32, 127], strides = [1, 1]} : vector<32x128xf32> to vector<32x127xf32>
    %15 = tpu.concatenate %13, %14 in 1 : vector<32x1xf32>, vector<32x127xf32> -> vector<32x128xf32>
    %16 = vector.extract_strided_slice %12 {offsets = [0, 1], sizes = [32, 127], strides = [1, 1]} : vector<32x128xf32> to vector<32x127xf32>
    %17 = tpu.concatenate %16, %13 in 1 : vector<32x127xf32>, vector<32x1xf32> -> vector<32x128xf32>
    %18 = tpu.concatenate %15, %12, %17 in 0 : vector<32x128xf32>, vector<32x128xf32>, vector<32x128xf32> -> vector<96x128xf32>
    %c0_11 = arith.constant 0 : index
    %c0_12 = arith.constant 0 : index
    %c0_13 = arith.constant 0 : index
    %19 = vector.load %arg5[%c0_11, %c0_12, %c0_13] : memref<2x32x96xbf16, #tpu.memory_space<vmem>>, vector<1x32x96xbf16>
    %20 = vector.shape_cast %19 : vector<1x32x96xbf16> to vector<32x96xbf16>
    %21 = arith.truncf %18 : vector<96x128xf32> to vector<96x128xbf16>
    %cst_14 = arith.constant dense<0.000000e+00> : vector<32x128xf32>
    %22 = tpu.matmul %20, %21, %cst_14 {dimension_numbers = #tpu.dot_dimension_numbers<[1], [0], [0], [1], [0, 0, 1, 1], [], []>} : vector<32x96xbf16>, vector<96x128xbf16>, vector<32x128xf32> -> vector<32x128xf32>
    %c0_15 = arith.constant 0 : index
    %c0_16 = arith.constant 0 : index
    %c0_17 = arith.constant 0 : index
    %23 = vector.load %arg6[%c0_15, %c0_16, %c0_17] : memref<2x32x1xf32, #tpu.memory_space<vmem>>, vector<1x32x1xf32>
    %24 = vector.shape_cast %23 : vector<1x32x1xf32> to vector<32x1xf32>
    %25 = vector.broadcast %24 : vector<32x1xf32> to vector<32x128xf32>
    %26 = arith.addf %22, %25 : vector<32x128xf32>
    %cst_18 = arith.constant 0.000000e+00 : f32
    %27 = vector.broadcast %cst_18 : f32 to vector<32x128xf32>
    %28 = arith.maximumf %26, %27 : vector<32x128xf32>
    %cst_19 = arith.constant dense<0.000000e+00> : vector<32xf32>
    %29 = vector.multi_reduction <add>, %28, %cst_19 [1] : vector<32x128xf32> to vector<32xf32>
    %30 = vector.shape_cast %29 : vector<32xf32> to vector<32x1xf32>
    %cst_20 = arith.constant 1.280000e+02 : f32
    %31 = vector.broadcast %cst_20 : f32 to vector<32x1xf32>
    %32 = arith.divf %30, %31 : vector<32x1xf32>
    %33 = vector.broadcast %32 : vector<32x1xf32> to vector<32x128xf32>
    %34 = arith.subf %28, %33 : vector<32x128xf32>
    %35 = arith.mulf %34, %34 : vector<32x128xf32>
    %cst_21 = arith.constant dense<0.000000e+00> : vector<32xf32>
    %36 = vector.multi_reduction <add>, %35, %cst_21 [1] : vector<32x128xf32> to vector<32xf32>
    %37 = vector.shape_cast %36 : vector<32xf32> to vector<32x1xf32>
    %cst_22 = arith.constant 1.280000e+02 : f32
    %38 = vector.broadcast %cst_22 : f32 to vector<32x1xf32>
    %39 = arith.divf %37, %38 : vector<32x1xf32>
    %40 = vector.broadcast %32 : vector<32x1xf32> to vector<32x128xf32>
    %41 = arith.subf %28, %40 : vector<32x128xf32>
    %cst_23 = arith.constant 9.99999974E-6 : f32
    %42 = vector.broadcast %cst_23 : f32 to vector<32x1xf32>
    %43 = arith.addf %39, %42 : vector<32x1xf32>
    %44 = math.rsqrt %43 : vector<32x1xf32>
    %45 = vector.broadcast %44 : vector<32x1xf32> to vector<32x128xf32>
    %46 = arith.mulf %41, %45 : vector<32x128xf32>
    %c0_24 = arith.constant 0 : index
    %c0_25 = arith.constant 0 : index
    %c0_26 = arith.constant 0 : index
    %47 = vector.load %arg7[%c0_24, %c0_25, %c0_26] : memref<2x48x32xbf16, #tpu.memory_space<vmem>>, vector<1x48x32xbf16>
    %48 = vector.shape_cast %47 : vector<1x48x32xbf16> to vector<48x32xbf16>
    %49 = arith.truncf %46 : vector<32x128xf32> to vector<32x128xbf16>
    %cst_27 = arith.constant dense<0.000000e+00> : vector<48x128xf32>
    %50 = tpu.matmul %48, %49, %cst_27 {dimension_numbers = #tpu.dot_dimension_numbers<[1], [0], [0], [1], [0, 0, 1, 1], [], []>} : vector<48x32xbf16>, vector<32x128xbf16>, vector<48x128xf32> -> vector<48x128xf32>
    %c0_28 = arith.constant 0 : index
    %c0_29 = arith.constant 0 : index
    %c0_30 = arith.constant 0 : index
    %51 = vector.load %arg8[%c0_28, %c0_29, %c0_30] : memref<2x48x1xf32, #tpu.memory_space<vmem>>, vector<1x48x1xf32>
    %52 = vector.shape_cast %51 : vector<1x48x1xf32> to vector<48x1xf32>
    %53 = vector.broadcast %52 : vector<48x1xf32> to vector<48x128xf32>
    %54 = arith.addf %50, %53 : vector<48x128xf32>
    %55 = vector.extract_strided_slice %54 {offsets = [0, 0], sizes = [16, 128], strides = [1, 1]} : vector<48x128xf32> to vector<16x128xf32>
    %56 = vector.extract_strided_slice %54 {offsets = [16, 0], sizes = [16, 128], strides = [1, 1]} : vector<48x128xf32> to vector<16x128xf32>
    %57 = vector.extract_strided_slice %54 {offsets = [32, 0], sizes = [16, 128], strides = [1, 1]} : vector<48x128xf32> to vector<16x128xf32>
    %58 = arith.truncf %55 : vector<16x128xf32> to vector<16x128xbf16>
    %59 = arith.truncf %56 : vector<16x128xf32> to vector<16x128xbf16>
    %cst_31 = arith.constant dense<0.000000e+00> : vector<128x128xf32>
    %60 = tpu.matmul %58, %59, %cst_31 {dimension_numbers = #tpu.dot_dimension_numbers<[0], [0], [1], [1], [0, 1, 1, 1], [], []>} : vector<16x128xbf16>, vector<16x128xbf16>, vector<128x128xf32> -> vector<128x128xf32>
    %cst_32 = arith.constant 2.500000e-01 : f32
    %61 = vector.broadcast %cst_32 : f32 to vector<128x128xf32>
    %62 = arith.mulf %60, %61 : vector<128x128xf32>
    %63 = vector.broadcast %4 : vector<1x128xf32> to vector<128x128xf32>
    %64 = arith.addf %62, %63 : vector<128x128xf32>
    %cst_33 = arith.constant dense<0xFF800000> : vector<128xf32>
    %65 = vector.multi_reduction <maximumf>, %64, %cst_33 [1] : vector<128x128xf32> to vector<128xf32>
    %66 = vector.shape_cast %65 : vector<128xf32> to vector<128x1xf32>
    %67 = vector.broadcast %66 : vector<128x1xf32> to vector<128x128xf32>
    %68 = arith.subf %64, %67 : vector<128x128xf32>
    %69 = math.exp %68 : vector<128x128xf32>
    %cst_34 = arith.constant dense<0.000000e+00> : vector<128xf32>
    %70 = vector.multi_reduction <add>, %69, %cst_34 [1] : vector<128x128xf32> to vector<128xf32>
    %71 = vector.shape_cast %70 : vector<128xf32> to vector<128x1xf32>
    %72 = tpu.reciprocal %71 {approx = true} : vector<128x1xf32> -> vector<128x1xf32>
    %73 = vector.broadcast %72 : vector<128x1xf32> to vector<128x128xf32>
    %74 = arith.mulf %69, %73 : vector<128x128xf32>
    %75 = vector.broadcast %1 : vector<1x128xf32> to vector<128x128xf32>
    %76 = arith.mulf %74, %75 : vector<128x128xf32>
    %77 = arith.truncf %57 : vector<16x128xf32> to vector<16x128xbf16>
    %78 = arith.truncf %76 : vector<128x128xf32> to vector<128x128xbf16>
    %cst_35 = arith.constant dense<0.000000e+00> : vector<16x128xf32>
    %79 = tpu.matmul %77, %78, %cst_35 {dimension_numbers = #tpu.dot_dimension_numbers<[1], [1], [0], [0], [0, 0, 1, 0], [], []>} : vector<16x128xbf16>, vector<128x128xbf16>, vector<16x128xf32> -> vector<16x128xf32>
    %c0_36 = arith.constant 0 : index
    %c0_37 = arith.constant 0 : index
    %c0_38 = arith.constant 0 : index
    %80 = vector.load %arg9[%c0_36, %c0_37, %c0_38] : memref<2x32x16xbf16, #tpu.memory_space<vmem>>, vector<1x32x16xbf16>
    %81 = vector.shape_cast %80 : vector<1x32x16xbf16> to vector<32x16xbf16>
    %cst_39 = arith.constant 0.000000e+00 : f32
    %82 = vector.broadcast %cst_39 : f32 to vector<16x128xf32>
    %83 = arith.maximumf %79, %82 : vector<16x128xf32>
    %84 = arith.truncf %83 : vector<16x128xf32> to vector<16x128xbf16>
    %cst_40 = arith.constant dense<0.000000e+00> : vector<32x128xf32>
    %85 = tpu.matmul %81, %84, %cst_40 {dimension_numbers = #tpu.dot_dimension_numbers<[1], [0], [0], [1], [0, 0, 1, 1], [], []>} : vector<32x16xbf16>, vector<16x128xbf16>, vector<32x128xf32> -> vector<32x128xf32>
    %c0_41 = arith.constant 0 : index
    %c0_42 = arith.constant 0 : index
    %c0_43 = arith.constant 0 : index
    %86 = vector.load %arg10[%c0_41, %c0_42, %c0_43] : memref<2x32x1xf32, #tpu.memory_space<vmem>>, vector<1x32x1xf32>
    %87 = vector.shape_cast %86 : vector<1x32x1xf32> to vector<32x1xf32>
    %88 = vector.broadcast %87 : vector<32x1xf32> to vector<32x128xf32>
    %89 = arith.addf %85, %88 : vector<32x128xf32>
    %90 = vector.broadcast %1 : vector<1x128xf32> to vector<32x128xf32>
    %91 = arith.mulf %89, %90 : vector<32x128xf32>
    %cst_44 = arith.constant 1.000000e+00 : f32
    %92 = vector.broadcast %cst_44 : f32 to vector<32x128xf32>
    %93 = arith.mulf %92, %91 : vector<32x128xf32>
    %94 = arith.addf %93, %28 : vector<32x128xf32>
    %c0_45 = arith.constant 0 : index
    %c0_46 = arith.constant 0 : index
    %c0_47 = arith.constant 0 : index
    %95 = vector.load %arg11[%c0_45, %c0_46, %c0_47] : memref<2x32x32xbf16, #tpu.memory_space<vmem>>, vector<1x32x32xbf16>
    %96 = vector.shape_cast %95 : vector<1x32x32xbf16> to vector<32x32xbf16>
    %97 = arith.truncf %94 : vector<32x128xf32> to vector<32x128xbf16>
    %cst_48 = arith.constant dense<0.000000e+00> : vector<32x128xf32>
    %98 = tpu.matmul %96, %97, %cst_48 {dimension_numbers = #tpu.dot_dimension_numbers<[1], [0], [0], [1], [0, 0, 1, 1], [], []>} : vector<32x32xbf16>, vector<32x128xbf16>, vector<32x128xf32> -> vector<32x128xf32>
    %99 = arith.addf %12, %98 : vector<32x128xf32>
    %c0_49 = arith.constant 0 : index
    %c0_50 = arith.constant 0 : index
    %c0_51 = arith.constant 0 : index
    %100 = vector.load %arg12[%c0_49, %c0_50, %c0_51] : memref<2x32x1xf32, #tpu.memory_space<vmem>>, vector<1x32x1xf32>
    %101 = vector.shape_cast %100 : vector<1x32x1xf32> to vector<32x1xf32>
    %102 = vector.broadcast %101 : vector<32x1xf32> to vector<32x128xf32>
    %103 = arith.addf %99, %102 : vector<32x128xf32>
    %104 = vector.broadcast %1 : vector<1x128xf32> to vector<32x128xf32>
    %105 = arith.mulf %103, %104 : vector<32x128xf32>
    %cst_52 = arith.constant 0.000000e+00 : f32
    %106 = vector.broadcast %cst_52 : f32 to vector<32x2xf32>
    %107 = vector.extract_strided_slice %105 {offsets = [0, 0], sizes = [32, 126], strides = [1, 1]} : vector<32x128xf32> to vector<32x126xf32>
    %108 = tpu.concatenate %106, %107 in 1 : vector<32x2xf32>, vector<32x126xf32> -> vector<32x128xf32>
    %109 = vector.extract_strided_slice %105 {offsets = [0, 2], sizes = [32, 126], strides = [1, 1]} : vector<32x128xf32> to vector<32x126xf32>
    %110 = tpu.concatenate %109, %106 in 1 : vector<32x126xf32>, vector<32x2xf32> -> vector<32x128xf32>
    %111 = tpu.concatenate %108, %105, %110 in 0 : vector<32x128xf32>, vector<32x128xf32>, vector<32x128xf32> -> vector<96x128xf32>
    %c1 = arith.constant 1 : index
    %c0_53 = arith.constant 0 : index
    %c0_54 = arith.constant 0 : index
    %112 = vector.load %arg5[%c1, %c0_53, %c0_54] : memref<2x32x96xbf16, #tpu.memory_space<vmem>>, vector<1x32x96xbf16>
    %113 = vector.shape_cast %112 : vector<1x32x96xbf16> to vector<32x96xbf16>
    %114 = arith.truncf %111 : vector<96x128xf32> to vector<96x128xbf16>
    %cst_55 = arith.constant dense<0.000000e+00> : vector<32x128xf32>
    %115 = tpu.matmul %113, %114, %cst_55 {dimension_numbers = #tpu.dot_dimension_numbers<[1], [0], [0], [1], [0, 0, 1, 1], [], []>} : vector<32x96xbf16>, vector<96x128xbf16>, vector<32x128xf32> -> vector<32x128xf32>
    %c1_56 = arith.constant 1 : index
    %c0_57 = arith.constant 0 : index
    %c0_58 = arith.constant 0 : index
    %116 = vector.load %arg6[%c1_56, %c0_57, %c0_58] : memref<2x32x1xf32, #tpu.memory_space<vmem>>, vector<1x32x1xf32>
    %117 = vector.shape_cast %116 : vector<1x32x1xf32> to vector<32x1xf32>
    %118 = vector.broadcast %117 : vector<32x1xf32> to vector<32x128xf32>
    %119 = arith.addf %115, %118 : vector<32x128xf32>
    %cst_59 = arith.constant 0.000000e+00 : f32
    %120 = vector.broadcast %cst_59 : f32 to vector<32x128xf32>
    %121 = arith.maximumf %119, %120 : vector<32x128xf32>
    %cst_60 = arith.constant dense<0.000000e+00> : vector<32xf32>
    %122 = vector.multi_reduction <add>, %121, %cst_60 [1] : vector<32x128xf32> to vector<32xf32>
    %123 = vector.shape_cast %122 : vector<32xf32> to vector<32x1xf32>
    %cst_61 = arith.constant 1.280000e+02 : f32
    %124 = vector.broadcast %cst_61 : f32 to vector<32x1xf32>
    %125 = arith.divf %123, %124 : vector<32x1xf32>
    %126 = vector.broadcast %125 : vector<32x1xf32> to vector<32x128xf32>
    %127 = arith.subf %121, %126 : vector<32x128xf32>
    %128 = arith.mulf %127, %127 : vector<32x128xf32>
    %cst_62 = arith.constant dense<0.000000e+00> : vector<32xf32>
    %129 = vector.multi_reduction <add>, %128, %cst_62 [1] : vector<32x128xf32> to vector<32xf32>
    %130 = vector.shape_cast %129 : vector<32xf32> to vector<32x1xf32>
    %cst_63 = arith.constant 1.280000e+02 : f32
    %131 = vector.broadcast %cst_63 : f32 to vector<32x1xf32>
    %132 = arith.divf %130, %131 : vector<32x1xf32>
    %133 = vector.broadcast %125 : vector<32x1xf32> to vector<32x128xf32>
    %134 = arith.subf %121, %133 : vector<32x128xf32>
    %cst_64 = arith.constant 9.99999974E-6 : f32
    %135 = vector.broadcast %cst_64 : f32 to vector<32x1xf32>
    %136 = arith.addf %132, %135 : vector<32x1xf32>
    %137 = math.rsqrt %136 : vector<32x1xf32>
    %138 = vector.broadcast %137 : vector<32x1xf32> to vector<32x128xf32>
    %139 = arith.mulf %134, %138 : vector<32x128xf32>
    %c1_65 = arith.constant 1 : index
    %c0_66 = arith.constant 0 : index
    %c0_67 = arith.constant 0 : index
    %140 = vector.load %arg7[%c1_65, %c0_66, %c0_67] : memref<2x48x32xbf16, #tpu.memory_space<vmem>>, vector<1x48x32xbf16>
    %141 = vector.shape_cast %140 : vector<1x48x32xbf16> to vector<48x32xbf16>
    %142 = arith.truncf %139 : vector<32x128xf32> to vector<32x128xbf16>
    %cst_68 = arith.constant dense<0.000000e+00> : vector<48x128xf32>
    %143 = tpu.matmul %141, %142, %cst_68 {dimension_numbers = #tpu.dot_dimension_numbers<[1], [0], [0], [1], [0, 0, 1, 1], [], []>} : vector<48x32xbf16>, vector<32x128xbf16>, vector<48x128xf32> -> vector<48x128xf32>
    %c1_69 = arith.constant 1 : index
    %c0_70 = arith.constant 0 : index
    %c0_71 = arith.constant 0 : index
    %144 = vector.load %arg8[%c1_69, %c0_70, %c0_71] : memref<2x48x1xf32, #tpu.memory_space<vmem>>, vector<1x48x1xf32>
    %145 = vector.shape_cast %144 : vector<1x48x1xf32> to vector<48x1xf32>
    %146 = vector.broadcast %145 : vector<48x1xf32> to vector<48x128xf32>
    %147 = arith.addf %143, %146 : vector<48x128xf32>
    %148 = vector.extract_strided_slice %147 {offsets = [0, 0], sizes = [16, 128], strides = [1, 1]} : vector<48x128xf32> to vector<16x128xf32>
    %149 = vector.extract_strided_slice %147 {offsets = [16, 0], sizes = [16, 128], strides = [1, 1]} : vector<48x128xf32> to vector<16x128xf32>
    %150 = vector.extract_strided_slice %147 {offsets = [32, 0], sizes = [16, 128], strides = [1, 1]} : vector<48x128xf32> to vector<16x128xf32>
    %151 = arith.truncf %148 : vector<16x128xf32> to vector<16x128xbf16>
    %152 = arith.truncf %149 : vector<16x128xf32> to vector<16x128xbf16>
    %cst_72 = arith.constant dense<0.000000e+00> : vector<128x128xf32>
    %153 = tpu.matmul %151, %152, %cst_72 {dimension_numbers = #tpu.dot_dimension_numbers<[0], [0], [1], [1], [0, 1, 1, 1], [], []>} : vector<16x128xbf16>, vector<16x128xbf16>, vector<128x128xf32> -> vector<128x128xf32>
    %cst_73 = arith.constant 2.500000e-01 : f32
    %154 = vector.broadcast %cst_73 : f32 to vector<128x128xf32>
    %155 = arith.mulf %153, %154 : vector<128x128xf32>
    %156 = vector.broadcast %4 : vector<1x128xf32> to vector<128x128xf32>
    %157 = arith.addf %155, %156 : vector<128x128xf32>
    %cst_74 = arith.constant dense<0xFF800000> : vector<128xf32>
    %158 = vector.multi_reduction <maximumf>, %157, %cst_74 [1] : vector<128x128xf32> to vector<128xf32>
    %159 = vector.shape_cast %158 : vector<128xf32> to vector<128x1xf32>
    %160 = vector.broadcast %159 : vector<128x1xf32> to vector<128x128xf32>
    %161 = arith.subf %157, %160 : vector<128x128xf32>
    %162 = math.exp %161 : vector<128x128xf32>
    %cst_75 = arith.constant dense<0.000000e+00> : vector<128xf32>
    %163 = vector.multi_reduction <add>, %162, %cst_75 [1] : vector<128x128xf32> to vector<128xf32>
    %164 = vector.shape_cast %163 : vector<128xf32> to vector<128x1xf32>
    %165 = tpu.reciprocal %164 {approx = true} : vector<128x1xf32> -> vector<128x1xf32>
    %166 = vector.broadcast %165 : vector<128x1xf32> to vector<128x128xf32>
    %167 = arith.mulf %162, %166 : vector<128x128xf32>
    %168 = vector.broadcast %1 : vector<1x128xf32> to vector<128x128xf32>
    %169 = arith.mulf %167, %168 : vector<128x128xf32>
    %170 = arith.truncf %150 : vector<16x128xf32> to vector<16x128xbf16>
    %171 = arith.truncf %169 : vector<128x128xf32> to vector<128x128xbf16>
    %cst_76 = arith.constant dense<0.000000e+00> : vector<16x128xf32>
    %172 = tpu.matmul %170, %171, %cst_76 {dimension_numbers = #tpu.dot_dimension_numbers<[1], [1], [0], [0], [0, 0, 1, 0], [], []>} : vector<16x128xbf16>, vector<128x128xbf16>, vector<16x128xf32> -> vector<16x128xf32>
    %c1_77 = arith.constant 1 : index
    %c0_78 = arith.constant 0 : index
    %c0_79 = arith.constant 0 : index
    %173 = vector.load %arg9[%c1_77, %c0_78, %c0_79] : memref<2x32x16xbf16, #tpu.memory_space<vmem>>, vector<1x32x16xbf16>
    %174 = vector.shape_cast %173 : vector<1x32x16xbf16> to vector<32x16xbf16>
    %cst_80 = arith.constant 0.000000e+00 : f32
    %175 = vector.broadcast %cst_80 : f32 to vector<16x128xf32>
    %176 = arith.maximumf %172, %175 : vector<16x128xf32>
    %177 = arith.truncf %176 : vector<16x128xf32> to vector<16x128xbf16>
    %cst_81 = arith.constant dense<0.000000e+00> : vector<32x128xf32>
    %178 = tpu.matmul %174, %177, %cst_81 {dimension_numbers = #tpu.dot_dimension_numbers<[1], [0], [0], [1], [0, 0, 1, 1], [], []>} : vector<32x16xbf16>, vector<16x128xbf16>, vector<32x128xf32> -> vector<32x128xf32>
    %c1_82 = arith.constant 1 : index
    %c0_83 = arith.constant 0 : index
    %c0_84 = arith.constant 0 : index
    %179 = vector.load %arg10[%c1_82, %c0_83, %c0_84] : memref<2x32x1xf32, #tpu.memory_space<vmem>>, vector<1x32x1xf32>
    %180 = vector.shape_cast %179 : vector<1x32x1xf32> to vector<32x1xf32>
    %181 = vector.broadcast %180 : vector<32x1xf32> to vector<32x128xf32>
    %182 = arith.addf %178, %181 : vector<32x128xf32>
    %183 = vector.broadcast %1 : vector<1x128xf32> to vector<32x128xf32>
    %184 = arith.mulf %182, %183 : vector<32x128xf32>
    %cst_85 = arith.constant 1.000000e+00 : f32
    %185 = vector.broadcast %cst_85 : f32 to vector<32x128xf32>
    %186 = arith.mulf %185, %184 : vector<32x128xf32>
    %187 = arith.addf %186, %121 : vector<32x128xf32>
    %c1_86 = arith.constant 1 : index
    %c0_87 = arith.constant 0 : index
    %c0_88 = arith.constant 0 : index
    %188 = vector.load %arg11[%c1_86, %c0_87, %c0_88] : memref<2x32x32xbf16, #tpu.memory_space<vmem>>, vector<1x32x32xbf16>
    %189 = vector.shape_cast %188 : vector<1x32x32xbf16> to vector<32x32xbf16>
    %190 = arith.truncf %187 : vector<32x128xf32> to vector<32x128xbf16>
    %cst_89 = arith.constant dense<0.000000e+00> : vector<32x128xf32>
    %191 = tpu.matmul %189, %190, %cst_89 {dimension_numbers = #tpu.dot_dimension_numbers<[1], [0], [0], [1], [0, 0, 1, 1], [], []>} : vector<32x32xbf16>, vector<32x128xbf16>, vector<32x128xf32> -> vector<32x128xf32>
    %192 = arith.addf %105, %191 : vector<32x128xf32>
    %c1_90 = arith.constant 1 : index
    %c0_91 = arith.constant 0 : index
    %c0_92 = arith.constant 0 : index
    %193 = vector.load %arg12[%c1_90, %c0_91, %c0_92] : memref<2x32x1xf32, #tpu.memory_space<vmem>>, vector<1x32x1xf32>
    %194 = vector.shape_cast %193 : vector<1x32x1xf32> to vector<32x1xf32>
    %195 = vector.broadcast %194 : vector<32x1xf32> to vector<32x128xf32>
    %196 = arith.addf %192, %195 : vector<32x128xf32>
    %197 = vector.broadcast %1 : vector<1x128xf32> to vector<32x128xf32>
    %198 = arith.mulf %196, %197 : vector<32x128xf32>
    %c0_93 = arith.constant 0 : index
    %c0_94 = arith.constant 0 : index
    %c0_95 = arith.constant 0 : index
    %199 = vector.load %arg16[%c0_93, %c0_94, %c0_95] : memref<1x32x128xf32, #tpu.memory_space<vmem>>, vector<1x32x128xf32>
    %200 = vector.shape_cast %199 : vector<1x32x128xf32> to vector<32x128xf32>
    %201 = vector.shape_cast %198 : vector<32x128xf32> to vector<1x32x128xf32>
    tpu.vector_store %arg16[%c0_93, %c0_94, %c0_95], %201 {strides = array<i32>} : memref<1x32x128xf32, #tpu.memory_space<vmem>>, vector<1x32x128xf32>,
    %c0_96 = arith.constant 0 : index
    %c0_97 = arith.constant 0 : index
    %202 = vector.load %arg13[%c0_96, %c0_97] : memref<8x32xbf16, #tpu.memory_space<vmem>>, vector<8x32xbf16>
    %203 = arith.truncf %198 : vector<32x128xf32> to vector<32x128xbf16>
    %cst_98 = arith.constant dense<0.000000e+00> : vector<8x128xf32>
    %204 = tpu.matmul %202, %203, %cst_98 {dimension_numbers = #tpu.dot_dimension_numbers<[1], [0], [0], [1], [0, 0, 1, 1], [], []>} : vector<8x32xbf16>, vector<32x128xbf16>, vector<8x128xf32> -> vector<8x128xf32>
    %c0_99 = arith.constant 0 : index
    %c0_100 = arith.constant 0 : index
    %205 = vector.load %arg14[%c0_99, %c0_100] : memref<8x1xf32, #tpu.memory_space<vmem>>, vector<8x1xf32>
    %206 = vector.broadcast %205 : vector<8x1xf32> to vector<8x128xf32>
    %207 = arith.addf %204, %206 : vector<8x128xf32>
    %208 = vector.broadcast %1 : vector<1x128xf32> to vector<8x128xf32>
    %209 = arith.mulf %207, %208 : vector<8x128xf32>
    %c0_101 = arith.constant 0 : index
    %c0_102 = arith.constant 0 : index
    %c0_103 = arith.constant 0 : index
    %210 = vector.load %arg15[%c0_101, %c0_102, %c0_103] : memref<1x8x128xf32, #tpu.memory_space<vmem>>, vector<1x8x128xf32>
    %211 = vector.shape_cast %210 : vector<1x8x128xf32> to vector<8x128xf32>
    %212 = vector.shape_cast %209 : vector<8x128xf32> to vector<1x8x128xf32>
    tpu.vector_store %arg15[%c0_101, %c0_102, %c0_103], %212 {strides = array<i32>} : memref<1x8x128xf32, #tpu.memory_space<vmem>>, vector<1x8x128xf32>,
    return
  }
  func.func @transform_0(%arg0: i32) -> (i32, i32, i32) {
    %c0_i32 = arith.constant 0 : i32
    %c0_i32_0 = arith.constant 0 : i32
    %c0_i32_1 = arith.constant 0 : i32
    return %arg0, %c0_i32, %c0_i32_0 : i32, i32, i32
  }
  func.func @transform_1(%arg0: i32) -> (i32, i32, i32) {
    %c0_i32 = arith.constant 0 : i32
    %c0_i32_0 = arith.constant 0 : i32
    %c0_i32_1 = arith.constant 0 : i32
    return %arg0, %c0_i32, %c0_i32_0 : i32, i32, i32
  }
  func.func @transform_2(%arg0: i32) -> (i32, i32) {
    %c0_i32 = arith.constant 0 : i32
    %c0_i32_0 = arith.constant 0 : i32
    %c0_i32_1 = arith.constant 0 : i32
    return %c0_i32, %c0_i32_0 : i32, i32
  }
  func.func @transform_3(%arg0: i32) -> (i32, i32) {
    %c0_i32 = arith.constant 0 : i32
    %c0_i32_0 = arith.constant 0 : i32
    %c0_i32_1 = arith.constant 0 : i32
    return %c0_i32, %c0_i32_0 : i32, i32
  }
  func.func @transform_4(%arg0: i32) -> (i32, i32, i32) {
    %c0_i32 = arith.constant 0 : i32
    %c0_i32_0 = arith.constant 0 : i32
    %c0_i32_1 = arith.constant 0 : i32
    %c0_i32_2 = arith.constant 0 : i32
    return %c0_i32, %c0_i32_0, %c0_i32_1 : i32, i32, i32
  }
  func.func @transform_5(%arg0: i32) -> (i32, i32, i32) {
    %c0_i32 = arith.constant 0 : i32
    %c0_i32_0 = arith.constant 0 : i32
    %c0_i32_1 = arith.constant 0 : i32
    %c0_i32_2 = arith.constant 0 : i32
    return %c0_i32, %c0_i32_0, %c0_i32_1 : i32, i32, i32
  }
  func.func @transform_6(%arg0: i32) -> (i32, i32, i32) {
    %c0_i32 = arith.constant 0 : i32
    %c0_i32_0 = arith.constant 0 : i32
    %c0_i32_1 = arith.constant 0 : i32
    %c0_i32_2 = arith.constant 0 : i32
    return %c0_i32, %c0_i32_0, %c0_i32_1 : i32, i32, i32
  }
  func.func @transform_7(%arg0: i32) -> (i32, i32, i32) {
    %c0_i32 = arith.constant 0 : i32
    %c0_i32_0 = arith.constant 0 : i32
    %c0_i32_1 = arith.constant 0 : i32
    %c0_i32_2 = arith.constant 0 : i32
    return %c0_i32, %c0_i32_0, %c0_i32_1 : i32, i32, i32
  }
  func.func @transform_8(%arg0: i32) -> (i32, i32, i32) {
    %c0_i32 = arith.constant 0 : i32
    %c0_i32_0 = arith.constant 0 : i32
    %c0_i32_1 = arith.constant 0 : i32
    %c0_i32_2 = arith.constant 0 : i32
    return %c0_i32, %c0_i32_0, %c0_i32_1 : i32, i32, i32
  }
  func.func @transform_9(%arg0: i32) -> (i32, i32, i32) {
    %c0_i32 = arith.constant 0 : i32
    %c0_i32_0 = arith.constant 0 : i32
    %c0_i32_1 = arith.constant 0 : i32
    %c0_i32_2 = arith.constant 0 : i32
    return %c0_i32, %c0_i32_0, %c0_i32_1 : i32, i32, i32
  }
  func.func @transform_10(%arg0: i32) -> (i32, i32, i32) {
    %c0_i32 = arith.constant 0 : i32
    %c0_i32_0 = arith.constant 0 : i32
    %c0_i32_1 = arith.constant 0 : i32
    %c0_i32_2 = arith.constant 0 : i32
    return %c0_i32, %c0_i32_0, %c0_i32_1 : i32, i32, i32
  }
  func.func @transform_11(%arg0: i32) -> (i32, i32, i32) {
    %c0_i32 = arith.constant 0 : i32
    %c0_i32_0 = arith.constant 0 : i32
    %c0_i32_1 = arith.constant 0 : i32
    %c0_i32_2 = arith.constant 0 : i32
    return %c0_i32, %c0_i32_0, %c0_i32_1 : i32, i32, i32
  }
  func.func @transform_12(%arg0: i32) -> (i32, i32) {
    %c0_i32 = arith.constant 0 : i32
    %c0_i32_0 = arith.constant 0 : i32
    %c0_i32_1 = arith.constant 0 : i32
    return %c0_i32, %c0_i32_0 : i32, i32
  }
  func.func @transform_13(%arg0: i32) -> (i32, i32) {
    %c0_i32 = arith.constant 0 : i32
    %c0_i32_0 = arith.constant 0 : i32
    %c0_i32_1 = arith.constant 0 : i32
    return %c0_i32, %c0_i32_0 : i32, i32
  }
  func.func @transform_14(%arg0: i32) -> (i32, i32, i32) {
    %c0_i32 = arith.constant 0 : i32
    %c0_i32_0 = arith.constant 0 : i32
    %c0_i32_1 = arith.constant 0 : i32
    return %arg0, %c0_i32, %c0_i32_0 : i32, i32, i32
  }
  func.func @transform_15(%arg0: i32) -> (i32, i32, i32) {
    %c0_i32 = arith.constant 0 : i32
    %c0_i32_0 = arith.constant 0 : i32
    %c0_i32_1 = arith.constant 0 : i32
    return %arg0, %c0_i32, %c0_i32_0 : i32, i32, i32
  }
}

</mosaic_0001>

<llo_original>
// kernel: tpu_custom_call.1
$region0: #{tpu_custom_call.1}
  #allocation0 [shape = 'u32[]', space=smem, size = 0x4, offset = 0x4, fixed_abs, tag = 'smem constant byte address 0x4 - core index']
  #allocation1 [shape = 'u32[72,128]{1,0:T(1,128)}', space=vmem, size = 0x9000, scoped, tag = 'internal scratch']
  %s0 = inlined_call_operand.vmem [shape: f32[2,16,128], index: 0, kind: input, shape index: {}]
  %s1 = inlined_call_operand.vmem [shape: f32[2,1,128], index: 1, kind: input, shape index: {}]
  %s2 = inlined_call_operand.vmem [shape: bf16[32,16], index: 2, kind: input, shape index: {}]
  %s3 = inlined_call_operand.vmem [shape: f32[32,1], index: 3, kind: input, shape index: {}]
  %s4 = inlined_call_operand.vmem [shape: bf16[2,32,96], index: 4, kind: input, shape index: {}]
  %s5 = inlined_call_operand.vmem [shape: f32[2,32,1], index: 5, kind: input, shape index: {}]
  %s6 = inlined_call_operand.vmem [shape: bf16[2,48,32], index: 6, kind: input, shape index: {}]
  %s7 = inlined_call_operand.vmem [shape: f32[2,48,1], index: 7, kind: input, shape index: {}]
  %s8 = inlined_call_operand.vmem [shape: bf16[2,32,16], index: 8, kind: input, shape index: {}]
  %s9 = inlined_call_operand.vmem [shape: f32[2,32,1], index: 9, kind: input, shape index: {}]
  %s10 = inlined_call_operand.vmem [shape: bf16[2,32,32], index: 10, kind: input, shape index: {}]
  %s11 = inlined_call_operand.vmem [shape: f32[2,32,1], index: 11, kind: input, shape index: {}]
  %s12 = inlined_call_operand.vmem [shape: bf16[8,32], index: 12, kind: input, shape index: {}]
  %s13 = inlined_call_operand.vmem [shape: f32[8,1], index: 13, kind: input, shape index: {}]
  %s14 = inlined_call_operand.hbm [shape: f32[2,8,128], index: 14, kind: output, shape index: {0}]
  %s15 = inlined_call_operand.hbm [shape: f32[2,32,128], index: 15, kind: output, shape index: {1}]
  %16 = xla_tuple %s14, %s15
  %s17 = sld [smem:[#allocation0]]
  $region97: #{tpu_custom_call.1} parent=0
    _
  %s19 = ssub.s32 1, %s17
  %s20 = scalar_select 0, %s19, %s17
  $region1: #{tpu_custom_call.1} parent=0
    #allocation2 [shape = 'u8[8192]{0}', space=vmem, size = 0x2000, scoped, tag = 'output window, operand 0']
    #allocation3 [shape = 's32[2]{0}', space=sflag, size = 0x8, scoped, tag = 'scoped memory for tpu_custom_call.1']
    #allocation4 [shape = 'u8[32768]{0}', space=vmem, size = 0x8000, scoped, tag = 'output window, operand 1']
    #allocation5 [shape = 's32[2]{0}', space=sflag, size = 0x8, scoped, tag = 'scoped memory for tpu_custom_call.1']
    %21 = vsyncpa [#allocation3], 0
    %s22 = scalar_lea.sflag [#allocation3], 1
    %23 = vsyncpa %s22, 0
    %24 = vsyncpa [#allocation5], 0
    %s25 = scalar_lea.sflag [#allocation5], 1
    %26 = vsyncpa %s25, 0
    loop: start=0, step=1, limit=4
    $region2: #{tpu_custom_call.1} parent=1 // loop_pre_header
      _
    $region3: #{tpu_custom_call.1} parent=1 // loop_header
      %s28 = sphi 0, %s32
      %p29 = scmp.ge.s32.totalorder %s28, 4
      %s38 = sphi 0, %s40
      %s41 = sphi 0, %s38
      %s42 = sphi 0, %s41
      %s58 = sphi 0, %s42
      %s64 = sphi 0, %s66
      %s67 = sphi 0, %s64
      %s68 = sphi 0, %s67
      %s84 = sphi 0, %s68
      %s88 = sphi 0, %s88
      %s90 = sphi 0, %s88
      %s91 = sphi 0, %s90
      %s105 = sphi 0, %s91
      %s109 = sphi 0, %s109
      %s111 = sphi 0, %s109
      %s112 = sphi 0, %s111
      %s126 = sphi 0, %s112
      %s130 = sphi 0, %s130
      %s132 = sphi 0, %s130
      %s133 = sphi 0, %s132
      %s147 = sphi 0, %s133
      %s151 = sphi 0, %s151
      %s153 = sphi 0, %s151
      %s154 = sphi 0, %s153
      %s168 = sphi 0, %s154
      %s172 = sphi 0, %s172
      %s174 = sphi 0, %s172
      %s175 = sphi 0, %s174
      %s189 = sphi 0, %s175
      %s193 = sphi 0, %s193
      %s195 = sphi 0, %s193
      %s196 = sphi 0, %s195
      %s210 = sphi 0, %s196
      %s214 = sphi 0, %s214
      %s216 = sphi 0, %s214
      %s217 = sphi 0, %s216
      %s231 = sphi 0, %s217
      %s235 = sphi 0, %s235
      %s237 = sphi 0, %s235
      %s238 = sphi 0, %s237
      %s252 = sphi 0, %s238
      %s256 = sphi 0, %s256
      %s258 = sphi 0, %s256
      %s259 = sphi 0, %s258
      %s273 = sphi 0, %s259
      %s277 = sphi 0, %s277
      %s279 = sphi 0, %s277
      %s280 = sphi 0, %s279
      %s294 = sphi 0, %s280
      %s298 = sphi 0, %s298
      %s300 = sphi 0, %s298
      %s301 = sphi 0, %s300
      %s315 = sphi 0, %s301
      %s319 = sphi 0, %s319
      %s321 = sphi 0, %s319
      %s322 = sphi 0, %s321
      %s336 = sphi 0, %s322
      %s342 = sphi 0, %s344
      %s345 = sphi 0, %s342
      %s346 = sphi 0, %s345
      %s362 = sphi 0, %s346
      %s368 = sphi 0, %s370
      %s371 = sphi 0, %s368
      %s372 = sphi 0, %s371
      %s388 = sphi 0, %s372
    $region4: #{tpu_custom_call.1} parent=1 // loop_header_branch
      %31 = sbr.rel (%p29) target = $region8
    $region5: #{tpu_custom_call.1} parent=1 // loop_body
      %s33 = ssub.s32 %s28, 1
      %s34 = ssub.s32 %s28, 2
      %s35 = sadd.s32 %s28, 1
      %s36 = ssub.s32 %s28, %s35
      %p37 = scmp.eq.s32.totalorder %s36, 0
      %s39 = sadd.s32 %s38, 1
      %s40 = scalar_select %p37, %s38, %s39
      %p43 = pneg %p37
      %p44 = scmp.eq.s32.totalorder %s28, 1
      %p45 = por %p43, %p44
      %p46 = scmp.ne.s32.totalorder %s38, %s41
      %p47 = scmp.eq.s32.totalorder %s28, 0
      %p48 = por %p46, %p47
      %p49 = scmp.ne.s32.totalorder %s38, %s41
      %p50 = scmp.eq.s32.totalorder %s33, 1
      %p51 = por %p49, %p50
      %p52 = scmp.ne.s32.totalorder %s41, %s42
      %p53 = scmp.eq.s32.totalorder %s33, 0
      %p54 = por %p52, %p53
      %p55 = scmp.ne.s32.totalorder %s41, %s42
      %p56 = scmp.eq.s32.totalorder %s34, 1
      %p57 = por %p55, %p56
      %p59 = scmp.ne.s32.totalorder %s42, %s58
      %p60 = scmp.eq.s32.totalorder %s34, 0
      %p61 = por %p59, %p60
      %s62 = ssub.s32 %s28, %s35
      %p63 = scmp.eq.s32.totalorder %s62, 0
      %s65 = sadd.s32 %s64, 1
      %s66 = scalar_select %p63, %s64, %s65
      %p69 = pneg %p63
      %p70 = scmp.eq.s32.totalorder %s28, 1
      %p71 = por %p69, %p70
      %p72 = scmp.ne.s32.totalorder %s64, %s67
      %p73 = scmp.eq.s32.totalorder %s28, 0
      %p74 = por %p72, %p73
      %p75 = scmp.ne.s32.totalorder %s64, %s67
      %p76 = scmp.eq.s32.totalorder %s33, 1
      %p77 = por %p75, %p76
      %p78 = scmp.ne.s32.totalorder %s67, %s68
      %p79 = scmp.eq.s32.totalorder %s33, 0
      %p80 = por %p78, %p79
      %p81 = scmp.ne.s32.totalorder %s67, %s68
      %p82 = scmp.eq.s32.totalorder %s34, 1
      %p83 = por %p81, %p82
      %p85 = scmp.ne.s32.totalorder %s68, %s84
      %p86 = scmp.eq.s32.totalorder %s34, 0
      %p87 = por %p85, %p86
      %s89 = sadd.s32 %s88, 1
      %p92 = scmp.eq.s32.totalorder %s28, 1
      %p93 = scmp.ne.s32.totalorder %s88, %s90
      %p94 = scmp.eq.s32.totalorder %s28, 0
      %p95 = por %p93, %p94
      %p96 = scmp.ne.s32.totalorder %s88, %s90
      %p97 = scmp.eq.s32.totalorder %s33, 1
      %p98 = por %p96, %p97
      %p99 = scmp.ne.s32.totalorder %s90, %s91
      %p100 = scmp.eq.s32.totalorder %s33, 0
      %p101 = por %p99, %p100
      %p102 = scmp.ne.s32.totalorder %s90, %s91
      %p103 = scmp.eq.s32.totalorder %s34, 1
      %p104 = por %p102, %p103
      %p106 = scmp.ne.s32.totalorder %s91, %s105
      %p107 = scmp.eq.s32.totalorder %s34, 0
      %p108 = por %p106, %p107
      %s110 = sadd.s32 %s109, 1
      %p113 = scmp.eq.s32.totalorder %s28, 1
      %p114 = scmp.ne.s32.totalorder %s109, %s111
      %p115 = scmp.eq.s32.totalorder %s28, 0
      %p116 = por %p114, %p115
      %p117 = scmp.ne.s32.totalorder %s109, %s111
      %p118 = scmp.eq.s32.totalorder %s33, 1
      %p119 = por %p117, %p118
      %p120 = scmp.ne.s32.totalorder %s111, %s112
      %p121 = scmp.eq.s32.totalorder %s33, 0
      %p122 = por %p120, %p121
      %p123 = scmp.ne.s32.totalorder %s111, %s112
      %p124 = scmp.eq.s32.totalorder %s34, 1
      %p125 = por %p123, %p124
      %p127 = scmp.ne.s32.totalorder %s112, %s126
      %p128 = scmp.eq.s32.totalorder %s34, 0
      %p129 = por %p127, %p128
      %s131 = sadd.s32 %s130, 1
      %p134 = scmp.eq.s32.totalorder %s28, 1
      %p135 = scmp.ne.s32.totalorder %s130, %s132
      %p136 = scmp.eq.s32.totalorder %s28, 0
      %p137 = por %p135, %p136
      %p138 = scmp.ne.s32.totalorder %s130, %s132
      %p139 = scmp.eq.s32.totalorder %s33, 1
      %p140 = por %p138, %p139
      %p141 = scmp.ne.s32.totalorder %s132, %s133
      %p142 = scmp.eq.s32.totalorder %s33, 0
      %p143 = por %p141, %p142
      %p144 = scmp.ne.s32.totalorder %s132, %s133
      %p145 = scmp.eq.s32.totalorder %s34, 1
      %p146 = por %p144, %p145
      %p148 = scmp.ne.s32.totalorder %s133, %s147
      %p149 = scmp.eq.s32.totalorder %s34, 0
      %p150 = por %p148, %p149
      %s152 = sadd.s32 %s151, 1
      %p155 = scmp.eq.s32.totalorder %s28, 1
      %p156 = scmp.ne.s32.totalorder %s151, %s153
      %p157 = scmp.eq.s32.totalorder %s28, 0
      %p158 = por %p156, %p157
      %p159 = scmp.ne.s32.totalorder %s151, %s153
      %p160 = scmp.eq.s32.totalorder %s33, 1
      %p161 = por %p159, %p160
      %p162 = scmp.ne.s32.totalorder %s153, %s154
      %p163 = scmp.eq.s32.totalorder %s33, 0
      %p164 = por %p162, %p163
      %p165 = scmp.ne.s32.totalorder %s153, %s154
      %p166 = scmp.eq.s32.totalorder %s34, 1
      %p167 = por %p165, %p166
      %p169 = scmp.ne.s32.totalorder %s154, %s168
      %p170 = scmp.eq.s32.totalorder %s34, 0
      %p171 = por %p169, %p170
      %s173 = sadd.s32 %s172, 1
      %p176 = scmp.eq.s32.totalorder %s28, 1
      %p177 = scmp.ne.s32.totalorder %s172, %s174
      %p178 = scmp.eq.s32.totalorder %s28, 0
      %p179 = por %p177, %p178
      %p180 = scmp.ne.s32.totalorder %s172, %s174
      %p181 = scmp.eq.s32.totalorder %s33, 1
      %p182 = por %p180, %p181
      %p183 = scmp.ne.s32.totalorder %s174, %s175
      %p184 = scmp.eq.s32.totalorder %s33, 0
      %p185 = por %p183, %p184
      %p186 = scmp.ne.s32.totalorder %s174, %s175
      %p187 = scmp.eq.s32.totalorder %s34, 1
      %p188 = por %p186, %p187
      %p190 = scmp.ne.s32.totalorder %s175, %s189
      %p191 = scmp.eq.s32.totalorder %s34, 0
      %p192 = por %p190, %p191
      %s194 = sadd.s32 %s193, 1
      %p197 = scmp.eq.s32.totalorder %s28, 1
      %p198 = scmp.ne.s32.totalorder %s193, %s195
      %p199 = scmp.eq.s32.totalorder %s28, 0
      %p200 = por %p198, %p199
      %p201 = scmp.ne.s32.totalorder %s193, %s195
      %p202 = scmp.eq.s32.totalorder %s33, 1
      %p203 = por %p201, %p202
      %p204 = scmp.ne.s32.totalorder %s195, %s196
      %p205 = scmp.eq.s32.totalorder %s33, 0
      %p206 = por %p204, %p205
      %p207 = scmp.ne.s32.totalorder %s195, %s196
      %p208 = scmp.eq.s32.totalorder %s34, 1
      %p209 = por %p207, %p208
      %p211 = scmp.ne.s32.totalorder %s196, %s210
      %p212 = scmp.eq.s32.totalorder %s34, 0
      %p213 = por %p211, %p212
      %s215 = sadd.s32 %s214, 1
      %p218 = scmp.eq.s32.totalorder %s28, 1
      %p219 = scmp.ne.s32.totalorder %s214, %s216
      %p220 = scmp.eq.s32.totalorder %s28, 0
      %p221 = por %p219, %p220
      %p222 = scmp.ne.s32.totalorder %s214, %s216
      %p223 = scmp.eq.s32.totalorder %s33, 1
      %p224 = por %p222, %p223
      %p225 = scmp.ne.s32.totalorder %s216, %s217
      %p226 = scmp.eq.s32.totalorder %s33, 0
      %p227 = por %p225, %p226
      %p228 = scmp.ne.s32.totalorder %s216, %s217
      %p229 = scmp.eq.s32.totalorder %s34, 1
      %p230 = por %p228, %p229
      %p232 = scmp.ne.s32.totalorder %s217, %s231
      %p233 = scmp.eq.s32.totalorder %s34, 0
      %p234 = por %p232, %p233
      %s236 = sadd.s32 %s235, 1
      %p239 = scmp.eq.s32.totalorder %s28, 1
      %p240 = scmp.ne.s32.totalorder %s235, %s237
      %p241 = scmp.eq.s32.totalorder %s28, 0
      %p242 = por %p240, %p241
      %p243 = scmp.ne.s32.totalorder %s235, %s237
      %p244 = scmp.eq.s32.totalorder %s33, 1
      %p245 = por %p243, %p244
      %p246 = scmp.ne.s32.totalorder %s237, %s238
      %p247 = scmp.eq.s32.totalorder %s33, 0
      %p248 = por %p246, %p247
      %p249 = scmp.ne.s32.totalorder %s237, %s238
      %p250 = scmp.eq.s32.totalorder %s34, 1
      %p251 = por %p249, %p250
      %p253 = scmp.ne.s32.totalorder %s238, %s252
      %p254 = scmp.eq.s32.totalorder %s34, 0
      %p255 = por %p253, %p254
      %s257 = sadd.s32 %s256, 1
      %p260 = scmp.eq.s32.totalorder %s28, 1
      %p261 = scmp.ne.s32.totalorder %s256, %s258
      %p262 = scmp.eq.s32.totalorder %s28, 0
      %p263 = por %p261, %p262
      %p264 = scmp.ne.s32.totalorder %s256, %s258
      %p265 = scmp.eq.s32.totalorder %s33, 1
      %p266 = por %p264, %p265
      %p267 = scmp.ne.s32.totalorder %s258, %s259
      %p268 = scmp.eq.s32.totalorder %s33, 0
      %p269 = por %p267, %p268
      %p270 = scmp.ne.s32.totalorder %s258, %s259
      %p271 = scmp.eq.s32.totalorder %s34, 1
      %p272 = por %p270, %p271
      %p274 = scmp.ne.s32.totalorder %s259, %s273
      %p275 = scmp.eq.s32.totalorder %s34, 0
      %p276 = por %p274, %p275
      %s278 = sadd.s32 %s277, 1
      %p281 = scmp.eq.s32.totalorder %s28, 1
      %p282 = scmp.ne.s32.totalorder %s277, %s279
      %p283 = scmp.eq.s32.totalorder %s28, 0
      %p284 = por %p282, %p283
      %p285 = scmp.ne.s32.totalorder %s277, %s279
      %p286 = scmp.eq.s32.totalorder %s33, 1
      %p287 = por %p285, %p286
      %p288 = scmp.ne.s32.totalorder %s279, %s280
      %p289 = scmp.eq.s32.totalorder %s33, 0
      %p290 = por %p288, %p289
      %p291 = scmp.ne.s32.totalorder %s279, %s280
      %p292 = scmp.eq.s32.totalorder %s34, 1
      %p293 = por %p291, %p292
      %p295 = scmp.ne.s32.totalorder %s280, %s294
      %p296 = scmp.eq.s32.totalorder %s34, 0
      %p297 = por %p295, %p296
      %s299 = sadd.s32 %s298, 1
      %p302 = scmp.eq.s32.totalorder %s28, 1
      %p303 = scmp.ne.s32.totalorder %s298, %s300
      %p304 = scmp.eq.s32.totalorder %s28, 0
      %p305 = por %p303, %p304
      %p306 = scmp.ne.s32.totalorder %s298, %s300
      %p307 = scmp.eq.s32.totalorder %s33, 1
      %p308 = por %p306, %p307
      %p309 = scmp.ne.s32.totalorder %s300, %s301
      %p310 = scmp.eq.s32.totalorder %s33, 0
      %p311 = por %p309, %p310
      %p312 = scmp.ne.s32.totalorder %s300, %s301
      %p313 = scmp.eq.s32.totalorder %s34, 1
      %p314 = por %p312, %p313
      %p316 = scmp.ne.s32.totalorder %s301, %s315
      %p317 = scmp.eq.s32.totalorder %s34, 0
      %p318 = por %p316, %p317
      %s320 = sadd.s32 %s319, 1
      %p323 = scmp.eq.s32.totalorder %s28, 1
      %p324 = scmp.ne.s32.totalorder %s319, %s321
      %p325 = scmp.eq.s32.totalorder %s28, 0
      %p326 = por %p324, %p325
      %p327 = scmp.ne.s32.totalorder %s319, %s321
      %p328 = scmp.eq.s32.totalorder %s33, 1
      %p329 = por %p327, %p328
      %p330 = scmp.ne.s32.totalorder %s321, %s322
      %p331 = scmp.eq.s32.totalorder %s33, 0
      %p332 = por %p330, %p331
      %p333 = scmp.ne.s32.totalorder %s321, %s322
      %p334 = scmp.eq.s32.totalorder %s34, 1
      %p335 = por %p333, %p334
      %p337 = scmp.ne.s32.totalorder %s322, %s336
      %p338 = scmp.eq.s32.totalorder %s34, 0
      %p339 = por %p337, %p338
      %s340 = ssub.s32 %s28, %s35
      %p341 = scmp.eq.s32.totalorder %s340, 0
      %s343 = sadd.s32 %s342, 1
      %s344 = scalar_select %p341, %s342, %s343
      %p347 = pneg %p341
      %p348 = scmp.eq.s32.totalorder %s28, 1
      %p349 = por %p347, %p348
      %p350 = scmp.ne.s32.totalorder %s342, %s345
      %p351 = scmp.eq.s32.totalorder %s28, 0
      %p352 = por %p350, %p351
      %p353 = scmp.ne.s32.totalorder %s342, %s345
      %p354 = scmp.eq.s32.totalorder %s33, 1
      %p355 = por %p353, %p354
      %p356 = scmp.ne.s32.totalorder %s345, %s346
      %p357 = scmp.eq.s32.totalorder %s33, 0
      %p358 = por %p356, %p357
      %p359 = scmp.ne.s32.totalorder %s345, %s346
      %p360 = scmp.eq.s32.totalorder %s34, 1
      %p361 = por %p359, %p360
      %p363 = scmp.ne.s32.totalorder %s346, %s362
      %p364 = scmp.eq.s32.totalorder %s34, 0
      %p365 = por %p363, %p364
      %s366 = ssub.s32 %s28, %s35
      %p367 = scmp.eq.s32.totalorder %s366, 0
      %s369 = sadd.s32 %s368, 1
      %s370 = scalar_select %p367, %s368, %s369
      %p373 = pneg %p367
      %p374 = scmp.eq.s32.totalorder %s28, 1
      %p375 = por %p373, %p374
      %p376 = scmp.ne.s32.totalorder %s368, %s371
      %p377 = scmp.eq.s32.totalorder %s28, 0
      %p378 = por %p376, %p377
      %p379 = scmp.ne.s32.totalorder %s368, %s371
      %p380 = scmp.eq.s32.totalorder %s33, 1
      %p381 = por %p379, %p380
      %p382 = scmp.ne.s32.totalorder %s371, %s372
      %p383 = scmp.eq.s32.totalorder %s33, 0
      %p384 = por %p382, %p383
      %p385 = scmp.ne.s32.totalorder %s371, %s372
      %p386 = scmp.eq.s32.totalorder %s34, 1
      %p387 = por %p385, %p386
      %p389 = scmp.ne.s32.totalorder %s372, %s388
      %p390 = scmp.eq.s32.totalorder %s34, 0
      %p391 = por %p389, %p390
      %p392 = scmp.le.s32.totalorder 1, %s28
      %p393 = scmp.lt.s32.totalorder %s28, 3
      %p394 = pnand %p392, %p393
      %p395 = pneg %p394
      // Predicated region
      $region9: #{tpu_custom_call.1} parent=5 // pred_check
        _
      $region10: #{tpu_custom_call.1} parent=5 // pred_check_branch
        %397 = sbr.rel (%p394) target = $region12
      $region11: #{tpu_custom_call.1} parent=5 // pred_region
        %s398 = ssub.s32 %s28, 1
        // Predicated region
        $region13: #{tpu_custom_call.1} parent=11 // pred_check
          %p399 = pneg %p101
        $region14: #{tpu_custom_call.1} parent=11 // pred_check_branch
          %401 = sbr.rel (%p399) target = $region16
        $region15: #{tpu_custom_call.1} parent=11 // pred_region
          _
        $region16: #{tpu_custom_call.1} parent=11 // pred_fallthru
          _
        // Predicated region
        $region17: #{tpu_custom_call.1} parent=11 // pred_check
          %p402 = pneg %p122
        $region18: #{tpu_custom_call.1} parent=11 // pred_check_branch
          %404 = sbr.rel (%p402) target = $region20
        $region19: #{tpu_custom_call.1} parent=11 // pred_region
          _
        $region20: #{tpu_custom_call.1} parent=11 // pred_fallthru
          _
        // Predicated region
        $region21: #{tpu_custom_call.1} parent=11 // pred_check
          %p405 = pneg %p143
        $region22: #{tpu_custom_call.1} parent=11 // pred_check_branch
          %407 = sbr.rel (%p405) target = $region24
        $region23: #{tpu_custom_call.1} parent=11 // pred_region
          _
        $region24: #{tpu_custom_call.1} parent=11 // pred_fallthru
          _
        // Predicated region
        $region25: #{tpu_custom_call.1} parent=11 // pred_check
          %p408 = pneg %p164
        $region26: #{tpu_custom_call.1} parent=11 // pred_check_branch
          %410 = sbr.rel (%p408) target = $region28
        $region27: #{tpu_custom_call.1} parent=11 // pred_region
          _
        $region28: #{tpu_custom_call.1} parent=11 // pred_fallthru
          _
        // Predicated region
        $region29: #{tpu_custom_call.1} parent=11 // pred_check
          %p411 = pneg %p185
        $region30: #{tpu_custom_call.1} parent=11 // pred_check_branch
          %413 = sbr.rel (%p411) target = $region32
        $region31: #{tpu_custom_call.1} parent=11 // pred_region
          _
        $region32: #{tpu_custom_call.1} parent=11 // pred_fallthru
          _
        // Predicated region
        $region33: #{tpu_custom_call.1} parent=11 // pred_check
          %p414 = pneg %p206
        $region34: #{tpu_custom_call.1} parent=11 // pred_check_branch
          %416 = sbr.rel (%p414) target = $region36
        $region35: #{tpu_custom_call.1} parent=11 // pred_region
          _
        $region36: #{tpu_custom_call.1} parent=11 // pred_fallthru
          _
        // Predicated region
        $region37: #{tpu_custom_call.1} parent=11 // pred_check
          %p417 = pneg %p227
        $region38: #{tpu_custom_call.1} parent=11 // pred_check_branch
          %419 = sbr.rel (%p417) target = $region40
        $region39: #{tpu_custom_call.1} parent=11 // pred_region
          _
        $region40: #{tpu_custom_call.1} parent=11 // pred_fallthru
          _
        // Predicated region
        $region41: #{tpu_custom_call.1} parent=11 // pred_check
          %p420 = pneg %p248
        $region42: #{tpu_custom_call.1} parent=11 // pred_check_branch
          %422 = sbr.rel (%p420) target = $region44
        $region43: #{tpu_custom_call.1} parent=11 // pred_region
          _
        $region44: #{tpu_custom_call.1} parent=11 // pred_fallthru
          _
        // Predicated region
        $region45: #{tpu_custom_call.1} parent=11 // pred_check
          %p423 = pneg %p269
        $region46: #{tpu_custom_call.1} parent=11 // pred_check_branch
          %425 = sbr.rel (%p423) target = $region48
        $region47: #{tpu_custom_call.1} parent=11 // pred_region
          _
        $region48: #{tpu_custom_call.1} parent=11 // pred_fallthru
          _
        // Predicated region
        $region49: #{tpu_custom_call.1} parent=11 // pred_check
          %p426 = pneg %p290
        $region50: #{tpu_custom_call.1} parent=11 // pred_check_branch
          %428 = sbr.rel (%p426) target = $region52
        $region51: #{tpu_custom_call.1} parent=11 // pred_region
          _
        $region52: #{tpu_custom_call.1} parent=11 // pred_fallthru
          _
        // Predicated region
        $region53: #{tpu_custom_call.1} parent=11 // pred_check
          %p429 = pneg %p311
        $region54: #{tpu_custom_call.1} parent=11 // pred_check_branch
          %431 = sbr.rel (%p429) target = $region56
        $region55: #{tpu_custom_call.1} parent=11 // pred_region
          _
        $region56: #{tpu_custom_call.1} parent=11 // pred_fallthru
          _
        // Predicated region
        $region57: #{tpu_custom_call.1} parent=11 // pred_check
          %p432 = pneg %p332
        $region58: #{tpu_custom_call.1} parent=11 // pred_check_branch
          %434 = sbr.rel (%p432) target = $region60
        $region59: #{tpu_custom_call.1} parent=11 // pred_region
          _
        $region60: #{tpu_custom_call.1} parent=11 // pred_fallthru
          _
      $region12: #{tpu_custom_call.1} parent=5 // pred_fallthru
        _
      %p435 = scmp.lt.s32.totalorder %s28, 2
      // Predicated region
      $region61: #{tpu_custom_call.1} parent=5 // pred_check
        %p436 = pneg %p435
      $region62: #{tpu_custom_call.1} parent=5 // pred_check_branch
        %438 = sbr.rel (%p436) target = $region64
      $region63: #{tpu_custom_call.1} parent=5 // pred_region
        // Predicated region
        $region65: #{tpu_custom_call.1} parent=63 // pred_check
          %p439 = pneg %p48
        $region66: #{tpu_custom_call.1} parent=63 // pred_check_branch
          %441 = sbr.rel (%p439) target = $region68
        $region67: #{tpu_custom_call.1} parent=63 // pred_region
          %p442 = scmp.lt.s32.totalorder %s28, 1
          %s443 = scalar_select %p442, %s28, 1
          %s444 = smul.addr %s443, 2
          %s445 = smul.addr %s444, 8
          %s446 = scalar_lea.vmem %s0, %s445
        $region68: #{tpu_custom_call.1} parent=63 // pred_fallthru
          _
        // Predicated region
        $region69: #{tpu_custom_call.1} parent=63 // pred_check
          %p447 = pneg %p74
        $region70: #{tpu_custom_call.1} parent=63 // pred_check_branch
          %449 = sbr.rel (%p447) target = $region72
        $region71: #{tpu_custom_call.1} parent=63 // pred_region
          %p450 = scmp.lt.s32.totalorder %s28, 1
          %s451 = scalar_select %p450, %s28, 1
          %s452 = scalar_lea.vmem %s1, %s451
        $region72: #{tpu_custom_call.1} parent=63 // pred_fallthru
          _
      $region64: #{tpu_custom_call.1} parent=5 // pred_fallthru
        _
      %p453 = scmp.le.s32.totalorder 1, %s28
      %p454 = scmp.lt.s32.totalorder %s28, 3
      %p455 = pnand %p453, %p454
      %p456 = pneg %p455
      // Predicated region
      $region73: #{tpu_custom_call.1} parent=5 // pred_check
        _
      $region74: #{tpu_custom_call.1} parent=5 // pred_check_branch
        %458 = sbr.rel (%p455) target = $region76
      $region75: #{tpu_custom_call.1} parent=5 // pred_region
        %s459 = ssub.s32 %s28, 1
        %p460 = scmp.lt.s32.totalorder %s33, 1
        %s461 = scalar_select %p460, %s33, 1
        %s462 = smul.addr %s461, 2
        %s463 = smul.addr %s462, 8
        %s464 = scalar_lea.vmem %s0, %s463
        %p465 = pneg %p54
        %p466 = pneg %p51
        %p467 = scmp.lt.s32.totalorder %s33, 1
        %s468 = scalar_select %p467, %s33, 1
        %s469 = scalar_lea.vmem %s1, %s468
        %p470 = pneg %p80
        %p471 = pneg %p77
        %p472 = pneg %p101
        %p473 = pneg %p98
        %p474 = pneg %p122
        %p475 = pneg %p119
        %p476 = pneg %p143
        %p477 = pneg %p140
        %p478 = pneg %p164
        %p479 = pneg %p161
        %p480 = pneg %p185
        %p481 = pneg %p182
        %p482 = pneg %p206
        %p483 = pneg %p203
        %p484 = pneg %p227
        %p485 = pneg %p224
        %p486 = pneg %p248
        %p487 = pneg %p245
        %p488 = pneg %p269
        %p489 = pneg %p266
        %p490 = pneg %p290
        %p491 = pneg %p287
        %p492 = pneg %p311
        %p493 = pneg %p308
        %p494 = pneg %p332
        %p495 = pneg %p329
        %p496 = pneg %p358
        %p497 = pneg %p355
        %s498 = sand.u32 %s345, 1
        %s499 = scalar_lea.sflag [#allocation3], %s498
        %s500 = sand.u32 %s345, 1
        %s501 = smul.addr %s500, 8
        %s502 = scalar_lea.vmem [#allocation2], %s501
        %p503 = pneg %p384
        %p504 = pneg %p381
        %s505 = sand.u32 %s371, 1
        %s506 = scalar_lea.sflag [#allocation5], %s505
        %s507 = sand.u32 %s371, 1
        %s508 = smul.addr %s507, 32
        %s509 = scalar_lea.vmem [#allocation4], %s508
        %p510 = scmp.lt.s32.totalorder %s33, 1
        %s511 = scalar_select %p510, %s33, 1
        %s512 = smul.addr %s511, 2
        %s513 = smul.addr %s512, 8
        %s514 = scalar_lea.vmem %s0, %s513
        %p515 = scmp.lt.s32.totalorder %s33, 1
        %s516 = scalar_select %p515, %s33, 1
        %s517 = scalar_lea.vmem %s1, %s516
        %v519 = vld [vmem:[%s517] sm:$0x1]
        %v520 = vadd.f32 %v519, 1e-06
        %v521 = vlog2.pop %v520
        %v522 = vmul.f32 %v521, 0.6931472
        %v523 = vld [vmem:[%s2] sm:$0xf]
        %v524 = vld [vmem:[%s2 + $0x4] sm:$0xf]
        %v525 = vld [vmem:[%s2 + $0x8] sm:$0xf]
        %v526 = vld [vmem:[%s2 + $0xc] sm:$0xf]
        %v527 = vld [vmem:[%s514] sm:$0xff]
        %v528 = vld [vmem:[%s514 + $0x8] sm:$0xff]
        %v529 = vpack.c.bf16 %v528, %v527
        %v530 = vld [vmem:[%s3] sm:$0xff]
        %v531 = vld [vmem:[%s3 + $0x8] sm:$0xff]
        %v532 = vld [vmem:[%s3 + $0x10] sm:$0xff]
        %v533 = vld [vmem:[%s3 + $0x18] sm:$0xff]
        %535 = vset.pattern.permute.xlu0 0
        %536 = vperm.xlu0 %535, %v530
        %v537 = vpop.permute.xlu0 %536
        %540 = vset.pattern.permute.xlu0 0
        %541 = vperm.xlu0 %540, %v531
        %v542 = vpop.permute.xlu0 %541
        %545 = vset.pattern.permute.xlu0 0
        %546 = vperm.xlu0 %545, %v532
        %v547 = vpop.permute.xlu0 %546
        %550 = vset.pattern.permute.xlu0 0
        %551 = vperm.xlu0 %550, %v533
        %v552 = vpop.permute.xlu0 %551
        %v558 = vunpack.c.l.b16 %v523
        %v559 = vunpack.c.l.b16 %v524
        %v560 = vunpack.c.l.b16 %v525
        %v561 = vunpack.c.l.b16 %v526
        %v562 = vpack.c.b16 %v559, %v558
        %v563 = vpack.c.b16 %v561, %v560
        %vm564 = vcmask 130048
        %v566 = vsel %vm564, %v562, 0
        %v569 = vsel %vm564, %v563, 0
        %571 = vmatpush.bf16.msra.mxu0 0
        %572 = vmatpush.bf16.msra.mxu0 0
        %573 = vmatpush.bf16.msra.mxu0 0
        %574 = vmatpush.bf16.msra.mxu0 0
        %575 = vmatpush.bf16.msra.mxu0 0
        %576 = vmatpush.bf16.msra.mxu0 0
        %577 = vmatpush.bf16.msra.mxu0 0
        %578 = vmatpush.bf16.msra.mxu0 %v529
        %579 = vmatmul.bf16.gmra.mxu0 %v566
        %v580 = vpop.f32.mrf.mxu0
        %v581 = vadd.f32 %v537, %v580
        %v582 = vpop.f32.mrf.mxu0
        %v583 = vadd.f32 %v542, %v582
        %584 = vmatmul.bf16.gmra.mxu0 %v569
        %v585 = vpop.f32.mrf.mxu0
        %v586 = vadd.f32 %v547, %v585
        %v587 = vpop.f32.mrf.mxu0
        %v588 = vadd.f32 %v552, %v587
        %589 = vdwg.mxu0
        %594 = vrot.lane.b32.xlu0 %v581, 1
        %v595 = vpop.permute.xlu0 %594
        %596 = vrot.lane.b32.xlu0 %v583, 1
        %v597 = vpop.permute.xlu0 %596
        %598 = vrot.lane.b32.xlu0 %v586, 1
        %v599 = vpop.permute.xlu0 %598
        %600 = vrot.lane.b32.xlu0 %v588, 1
        %v601 = vpop.permute.xlu0 %600
        %vm606 = vcmask 7168
        %v607 = vsel %vm606, 0.0, %v595
        %v608 = vsel %vm606, 0.0, %v597
        %v609 = vsel %vm606, 0.0, %v599
        %v610 = vsel %vm606, 0.0, %v601
        %611 = vrot.lane.b32.xlu0 %v581, 127
        %v612 = vpop.permute.xlu0 %611
        %613 = vrot.lane.b32.xlu0 %v583, 127
        %v614 = vpop.permute.xlu0 %613
        %615 = vrot.lane.b32.xlu0 %v586, 127
        %v616 = vpop.permute.xlu0 %615
        %617 = vrot.lane.b32.xlu0 %v588, 127
        %v618 = vpop.permute.xlu0 %617
        %vm623 = vcmask 1039360
        %v624 = vsel %vm623, %v612, 0.0
        %v625 = vsel %vm623, %v614, 0.0
        %v626 = vsel %vm623, %v616, 0.0
        %v627 = vsel %vm623, %v618, 0.0
        %v628 = vld [vmem:[%s4] sm:$0xf]
        %v629 = vld [vmem:[%s4 + $0x4] sm:$0xf]
        %v630 = vld [vmem:[%s4 + $0x8] sm:$0xf]
        %v631 = vld [vmem:[%s4 + $0xc] sm:$0xf]
        %v632 = vpack.c.bf16 %v608, %v607
        %v633 = vpack.c.bf16 %v610, %v609
        %v634 = vpack.c.bf16 %v583, %v581
        %v635 = vpack.c.bf16 %v588, %v586
        %v636 = vpack.c.bf16 %v625, %v624
        %v637 = vpack.c.bf16 %v627, %v626
        %v638 = vld [vmem:[%s5] sm:$0xff]
        %v639 = vld [vmem:[%s5 + $0x8] sm:$0xff]
        %v640 = vld [vmem:[%s5 + $0x10] sm:$0xff]
        %v641 = vld [vmem:[%s5 + $0x18] sm:$0xff]
        %643 = vset.pattern.permute.xlu0 0
        %644 = vperm.xlu0 %643, %v638
        %v645 = vpop.permute.xlu0 %644
        %648 = vset.pattern.permute.xlu0 0
        %649 = vperm.xlu0 %648, %v639
        %v650 = vpop.permute.xlu0 %649
        %653 = vset.pattern.permute.xlu0 0
        %654 = vperm.xlu0 %653, %v640
        %v655 = vpop.permute.xlu0 %654
        %658 = vset.pattern.permute.xlu0 0
        %659 = vperm.xlu0 %658, %v641
        %v660 = vpop.permute.xlu0 %659
        %v666 = vunpack.c.l.b16 %v628
        %v667 = vunpack.c.l.b16 %v629
        %v668 = vunpack.c.l.b16 %v630
        %v669 = vunpack.c.l.b16 %v631
        %v670 = vpack.c.b16 %v667, %v666
        %v671 = vpack.c.b16 %v669, %v668
        %vm672 = vcmask 785408
        %v674 = vsel %vm672, %v670, 0
        %v677 = vsel %vm672, %v671, 0
        %679 = vmatpush.bf16.msra.mxu0 0
        %680 = vmatpush.bf16.msra.mxu0 0
        %681 = vmatpush.bf16.msra.mxu0 %v637
        %682 = vmatpush.bf16.msra.mxu0 %v636
        %683 = vmatpush.bf16.msra.mxu0 %v635
        %684 = vmatpush.bf16.msra.mxu0 %v634
        %685 = vmatpush.bf16.msra.mxu0 %v633
        %686 = vmatpush.bf16.msra.mxu0 %v632
        %687 = vmatmul.bf16.gmra.mxu0 %v674
        %v688 = vpop.f32.mrf.mxu0
        %v689 = vadd.f32 %v645, %v688
        %v690 = vpop.f32.mrf.mxu0
        %v691 = vadd.f32 %v650, %v690
        %692 = vmatmul.bf16.gmra.mxu0 %v677
        %v693 = vpop.f32.mrf.mxu0
        %v694 = vadd.f32 %v655, %v693
        %v695 = vpop.f32.mrf.mxu0
        %v696 = vadd.f32 %v660, %v695
        %697 = vdwg.mxu0
        %v698 = vmax.f32 %v689, 0.0
        %v699 = vmax.f32 %v691, 0.0
        %v700 = vmax.f32 %v694, 0.0
        %v701 = vmax.f32 %v696, 0.0
        %702 = vadd.xlane.f32.xlu0 %v698
        %v703 = vpop.xlane.xlu0 %702
        %704 = vadd.xlane.f32.xlu0 %v699
        %v705 = vpop.xlane.xlu0 %704
        %706 = vadd.xlane.f32.xlu0 %v700
        %v707 = vpop.xlane.xlu0 %706
        %708 = vadd.xlane.f32.xlu0 %v701
        %v709 = vpop.xlane.xlu0 %708
        %v710 = vrcp.pop 128.0
        %v711 = vmul.f32 128.0, %v710
        %v712 = vsub.f32 1.0, %v711
        %v713 = vmul.f32 %v710, %v712
        %v714 = vadd.f32 %v710, %v713
        %vm715 = vweird.f32 %v710
        %v716 = vsel %vm715, %v710, %v714
        %v717 = vmul.f32 %v703, %v716
        %v718 = vmul.f32 %v705, %v716
        %v719 = vmul.f32 %v707, %v716
        %v720 = vmul.f32 %v709, %v716
        %v721 = vsub.f32 %v698, %v717
        %v722 = vsub.f32 %v699, %v718
        %v723 = vsub.f32 %v700, %v719
        %v724 = vsub.f32 %v701, %v720
        %v725 = vmul.f32 %v721, %v721
        %v726 = vmul.f32 %v722, %v722
        %v727 = vmul.f32 %v723, %v723
        %v728 = vmul.f32 %v724, %v724
        %729 = vadd.xlane.f32.xlu0 %v725
        %v730 = vpop.xlane.xlu0 %729
        %731 = vadd.xlane.f32.xlu0 %v726
        %v732 = vpop.xlane.xlu0 %731
        %733 = vadd.xlane.f32.xlu0 %v727
        %v734 = vpop.xlane.xlu0 %733
        %735 = vadd.xlane.f32.xlu0 %v728
        %v736 = vpop.xlane.xlu0 %735
        %v737 = vmul.f32 %v730, %v716
        %v738 = vmul.f32 %v732, %v716
        %v739 = vmul.f32 %v734, %v716
        %v740 = vmul.f32 %v736, %v716
        %v741 = vadd.f32 %v737, 1e-05
        %v742 = vadd.f32 %v738, 1e-05
        %v743 = vadd.f32 %v739, 1e-05
        %v744 = vadd.f32 %v740, 1e-05
        %v745 = vrsqrt.pop %v741
        %v746 = vmul.f32 %v745, %v741
        %v747 = vmul.f32 %v746, %v745
        %v748 = vmul.f32 0.5, %v747
        %v749 = vsub.f32 1.5, %v748
        %v750 = vmul.f32 %v745, %v749
        %vm751 = vweird.f32 %v741
        %vm752 = vweird.f32 %v745
        %vm753 = vmor %vm751, %vm752
        %v754 = vsel %vm753, %v745, %v750
        %v755 = vrsqrt.pop %v742
        %v756 = vmul.f32 %v755, %v742
        %v757 = vmul.f32 %v756, %v755
        %v758 = vmul.f32 0.5, %v757
        %v759 = vsub.f32 1.5, %v758
        %v760 = vmul.f32 %v755, %v759
        %vm761 = vweird.f32 %v742
        %vm762 = vweird.f32 %v755
        %vm763 = vmor %vm761, %vm762
        %v764 = vsel %vm763, %v755, %v760
        %v765 = vrsqrt.pop %v743
        %v766 = vmul.f32 %v765, %v743
        %v767 = vmul.f32 %v766, %v765
        %v768 = vmul.f32 0.5, %v767
        %v769 = vsub.f32 1.5, %v768
        %v770 = vmul.f32 %v765, %v769
        %vm771 = vweird.f32 %v743
        %vm772 = vweird.f32 %v765
        %vm773 = vmor %vm771, %vm772
        %v774 = vsel %vm773, %v765, %v770
        %v775 = vrsqrt.pop %v744
        %v776 = vmul.f32 %v775, %v744
        %v777 = vmul.f32 %v776, %v775
        %v778 = vmul.f32 0.5, %v777
        %v779 = vsub.f32 1.5, %v778
        %v780 = vmul.f32 %v775, %v779
        %vm781 = vweird.f32 %v744
        %vm782 = vweird.f32 %v775
        %vm783 = vmor %vm781, %vm782
        %v784 = vsel %vm783, %v775, %v780
        %v785 = vmul.f32 %v721, %v754
        %v786 = vmul.f32 %v722, %v764
        %v787 = vmul.f32 %v723, %v774
        %v788 = vmul.f32 %v724, %v784
        %v789 = vld [vmem:[%s6] sm:$0xf]
        %v790 = vld [vmem:[%s6 + $0x4] sm:$0xf]
        %v791 = vld [vmem:[%s6 + $0x8] sm:$0xf]
        %v792 = vld [vmem:[%s6 + $0xc] sm:$0xf]
        %v793 = vld [vmem:[%s6 + $0x10] sm:$0xf]
        %v794 = vld [vmem:[%s6 + $0x14] sm:$0xf]
        %v795 = vpack.c.bf16 %v786, %v785
        %v796 = vpack.c.bf16 %v788, %v787
        %v797 = vld [vmem:[%s7] sm:$0xff]
        %v798 = vld [vmem:[%s7 + $0x8] sm:$0xff]
        %v799 = vld [vmem:[%s7 + $0x10] sm:$0xff]
        %v800 = vld [vmem:[%s7 + $0x18] sm:$0xff]
        %v801 = vld [vmem:[%s7 + $0x20] sm:$0xff]
        %v802 = vld [vmem:[%s7 + $0x28] sm:$0xff]
        %804 = vset.pattern.permute.xlu0 0
        %805 = vperm.xlu0 %804, %v797
        %v806 = vpop.permute.xlu0 %805
        %809 = vset.pattern.permute.xlu0 0
        %810 = vperm.xlu0 %809, %v798
        %v811 = vpop.permute.xlu0 %810
        %814 = vset.pattern.permute.xlu0 0
        %815 = vperm.xlu0 %814, %v799
        %v816 = vpop.permute.xlu0 %815
        %819 = vset.pattern.permute.xlu0 0
        %820 = vperm.xlu0 %819, %v800
        %v821 = vpop.permute.xlu0 %820
        %824 = vset.pattern.permute.xlu0 0
        %825 = vperm.xlu0 %824, %v801
        %v826 = vpop.permute.xlu0 %825
        %829 = vset.pattern.permute.xlu0 0
        %830 = vperm.xlu0 %829, %v802
        %v831 = vpop.permute.xlu0 %830
        %v839 = vunpack.c.l.b16 %v789
        %v840 = vunpack.c.l.b16 %v790
        %v841 = vunpack.c.l.b16 %v791
        %v842 = vunpack.c.l.b16 %v792
        %v843 = vunpack.c.l.b16 %v793
        %v844 = vunpack.c.l.b16 %v794
        %v845 = vpack.c.b16 %v840, %v839
        %v846 = vpack.c.b16 %v842, %v841
        %v847 = vpack.c.b16 %v844, %v843
        %vm848 = vcmask 261120
        %v850 = vsel %vm848, %v845, 0
        %v853 = vsel %vm848, %v846, 0
        %v856 = vsel %vm848, %v847, 0
        %858 = vmatpush.bf16.msra.mxu0 0
        %859 = vmatpush.bf16.msra.mxu0 0
        %860 = vmatpush.bf16.msra.mxu0 0
        %861 = vmatpush.bf16.msra.mxu0 0
        %862 = vmatpush.bf16.msra.mxu0 0
        %863 = vmatpush.bf16.msra.mxu0 0
        %864 = vmatpush.bf16.msra.mxu0 %v796
        %865 = vmatpush.bf16.msra.mxu0 %v795
        %866 = vmatmul.bf16.gmra.mxu0 %v850
        %v867 = vpop.f32.mrf.mxu0
        %v868 = vadd.f32 %v806, %v867
        %v869 = vpop.f32.mrf.mxu0
        %v870 = vadd.f32 %v811, %v869
        %871 = vmatmul.bf16.gmra.mxu0 %v853
        %v872 = vpop.f32.mrf.mxu0
        %v873 = vadd.f32 %v816, %v872
        %v874 = vpop.f32.mrf.mxu0
        %v875 = vadd.f32 %v821, %v874
        %876 = vmatmul.bf16.gmra.mxu0 %v856
        %v877 = vpop.f32.mrf.mxu0
        %v878 = vadd.f32 %v826, %v877
        %v879 = vpop.f32.mrf.mxu0
        %v880 = vadd.f32 %v831, %v879
        %881 = vdwg.mxu0
        %v882 = vpack.c.bf16 %v870, %v868
        %v883 = vpack.c.bf16 %v875, %v873
        %884 = vxpose.xlu0.c.b16.start [1/8] %v882, 128
        %885 = vxpose.xlu0.c.b16.cont [2/8] 0, 128
        %886 = vxpose.xlu0.c.b16.cont [3/8] 0, 128
        %887 = vxpose.xlu0.c.b16.cont [4/8] 0, 128
        %888 = vxpose.xlu0.c.b16.cont [5/8] 0, 128
        %889 = vxpose.xlu0.c.b16.cont [6/8] 0, 128
        %890 = vxpose.xlu0.c.b16.cont [7/8] 0, 128
        %891 = vxpose.xlu0.c.b16.end [8/8] 0, 128
        %v892 = vpop.trf.xlu0
        %v893 = vpop.trf.xlu0
        %v894 = vpop.trf.xlu0
        %v895 = vpop.trf.xlu0
        %v896 = vpop.trf.xlu0
        %v897 = vpop.trf.xlu0
        %v898 = vpop.trf.xlu0
        %v899 = vpop.trf.xlu0
        %v901 = vsel %vm564, %v892, 0
        %v904 = vsel %vm564, %v893, 0
        %v907 = vsel %vm564, %v894, 0
        %v910 = vsel %vm564, %v895, 0
        %v913 = vsel %vm564, %v896, 0
        %v916 = vsel %vm564, %v897, 0
        %v919 = vsel %vm564, %v898, 0
        %v922 = vsel %vm564, %v899, 0
        %924 = vmatpush.bf16.msra.mxu0 0
        %925 = vmatpush.bf16.msra.mxu0 0
        %926 = vmatpush.bf16.msra.mxu0 0
        %927 = vmatpush.bf16.msra.mxu0 0
        %928 = vmatpush.bf16.msra.mxu0 0
        %929 = vmatpush.bf16.msra.mxu0 0
        %930 = vmatpush.bf16.msra.mxu0 0
        %931 = vmatpush.bf16.msra.mxu0 %v883
        %932 = vmatmul.bf16.gmra.mxu0 %v901
        %v933 = vpop.f32.mrf.mxu0
        %v934 = vadd.f32 0.0, %v933
        %v935 = vpop.f32.mrf.mxu0
        %v936 = vadd.f32 0.0, %v935
        %937 = vmatmul.bf16.gmra.mxu0 %v904
        %v938 = vpop.f32.mrf.mxu0
        %v939 = vadd.f32 0.0, %v938
        %v940 = vpop.f32.mrf.mxu0
        %v941 = vadd.f32 0.0, %v940
        %942 = vmatmul.bf16.gmra.mxu0 %v907
        %v943 = vpop.f32.mrf.mxu0
        %v944 = vadd.f32 0.0, %v943
        %v945 = vpop.f32.mrf.mxu0
        %v946 = vadd.f32 0.0, %v945
        %947 = vmatmul.bf16.gmra.mxu0 %v910
        %v948 = vpop.f32.mrf.mxu0
        %v949 = vadd.f32 0.0, %v948
        %v950 = vpop.f32.mrf.mxu0
        %v951 = vadd.f32 0.0, %v950
        %952 = vmatmul.bf16.gmra.mxu0 %v913
        %v953 = vpop.f32.mrf.mxu0
        %v954 = vadd.f32 0.0, %v953
        %v955 = vpop.f32.mrf.mxu0
        %v956 = vadd.f32 0.0, %v955
        %957 = vmatmul.bf16.gmra.mxu0 %v916
        %v958 = vpop.f32.mrf.mxu0
        %v959 = vadd.f32 0.0, %v958
        %v960 = vpop.f32.mrf.mxu0
        %v961 = vadd.f32 0.0, %v960
        %962 = vmatmul.bf16.gmra.mxu0 %v919
        %v963 = vpop.f32.mrf.mxu0
        %v964 = vadd.f32 0.0, %v963
        %v965 = vpop.f32.mrf.mxu0
        %v966 = vadd.f32 0.0, %v965
        %967 = vmatmul.bf16.gmra.mxu0 %v922
        %v968 = vpop.f32.mrf.mxu0
        %v969 = vadd.f32 0.0, %v968
        %v970 = vpop.f32.mrf.mxu0
        %v971 = vadd.f32 0.0, %v970
        %972 = vdwg.mxu0
        %v973 = vmul.f32 %v934, 0.25
        %v974 = vmul.f32 %v936, 0.25
        %v975 = vmul.f32 %v939, 0.25
        %v976 = vmul.f32 %v941, 0.25
        %v977 = vmul.f32 %v944, 0.25
        %v978 = vmul.f32 %v946, 0.25
        %v979 = vmul.f32 %v949, 0.25
        %v980 = vmul.f32 %v951, 0.25
        %v981 = vmul.f32 %v954, 0.25
        %v982 = vmul.f32 %v956, 0.25
        %v983 = vmul.f32 %v959, 0.25
        %v984 = vmul.f32 %v961, 0.25
        %v985 = vmul.f32 %v964, 0.25
        %v986 = vmul.f32 %v966, 0.25
        %v987 = vmul.f32 %v969, 0.25
        %v988 = vmul.f32 %v971, 0.25
        %v990 = vperm.slane %v522, 0
        %v992 = vadd.f32 %v973, %v990
        %v993 = vadd.f32 %v974, %v990
        %v994 = vadd.f32 %v975, %v990
        %v995 = vadd.f32 %v976, %v990
        %v996 = vadd.f32 %v977, %v990
        %v997 = vadd.f32 %v978, %v990
        %v998 = vadd.f32 %v979, %v990
        %v999 = vadd.f32 %v980, %v990
        %v1000 = vadd.f32 %v981, %v990
        %v1001 = vadd.f32 %v982, %v990
        %v1002 = vadd.f32 %v983, %v990
        %v1003 = vadd.f32 %v984, %v990
        %v1004 = vadd.f32 %v985, %v990
        %v1005 = vadd.f32 %v986, %v990
        %v1006 = vadd.f32 %v987, %v990
        %v1007 = vadd.f32 %v988, %v990
        %1008 = vmax.xlane.f32.xlu0 %v992
        %v1009 = vpop.xlane.xlu0 %1008
        %1010 = vmax.xlane.f32.xlu0 %v993
        %v1011 = vpop.xlane.xlu0 %1010
        %1012 = vmax.xlane.f32.xlu0 %v994
        %v1013 = vpop.xlane.xlu0 %1012
        %1014 = vmax.xlane.f32.xlu0 %v995
        %v1015 = vpop.xlane.xlu0 %1014
        %1016 = vmax.xlane.f32.xlu0 %v996
        %v1017 = vpop.xlane.xlu0 %1016
        %1018 = vmax.xlane.f32.xlu0 %v997
        %v1019 = vpop.xlane.xlu0 %1018
        %1020 = vmax.xlane.f32.xlu0 %v998
        %v1021 = vpop.xlane.xlu0 %1020
        %1022 = vmax.xlane.f32.xlu0 %v999
        %v1023 = vpop.xlane.xlu0 %1022
        %1024 = vmax.xlane.f32.xlu0 %v1000
        %v1025 = vpop.xlane.xlu0 %1024
        %1026 = vmax.xlane.f32.xlu0 %v1001
        %v1027 = vpop.xlane.xlu0 %1026
        %1028 = vmax.xlane.f32.xlu0 %v1002
        %v1029 = vpop.xlane.xlu0 %1028
        %1030 = vmax.xlane.f32.xlu0 %v1003
        %v1031 = vpop.xlane.xlu0 %1030
        %1032 = vmax.xlane.f32.xlu0 %v1004
        %v1033 = vpop.xlane.xlu0 %1032
        %1034 = vmax.xlane.f32.xlu0 %v1005
        %v1035 = vpop.xlane.xlu0 %1034
        %1036 = vmax.xlane.f32.xlu0 %v1006
        %v1037 = vpop.xlane.xlu0 %1036
        %1038 = vmax.xlane.f32.xlu0 %v1007
        %v1039 = vpop.xlane.xlu0 %1038
        %v1040 = vsub.f32 %v992, %v1009
        %v1041 = vsub.f32 %v993, %v1011
        %v1042 = vsub.f32 %v994, %v1013
        %v1043 = vsub.f32 %v995, %v1015
        %v1044 = vsub.f32 %v996, %v1017
        %v1045 = vsub.f32 %v997, %v1019
        %v1046 = vsub.f32 %v998, %v1021
        %v1047 = vsub.f32 %v999, %v1023
        %v1048 = vsub.f32 %v1000, %v1025
        %v1049 = vsub.f32 %v1001, %v1027
        %v1050 = vsub.f32 %v1002, %v1029
        %v1051 = vsub.f32 %v1003, %v1031
        %v1052 = vsub.f32 %v1004, %v1033
        %v1053 = vsub.f32 %v1005, %v1035
        %v1054 = vsub.f32 %v1006, %v1037
        %v1055 = vsub.f32 %v1007, %v1039
        %v1056 = vmul.f32 %v1040, 1.442695
        %v1057 = vpow.pop %v1056
        %v1058 = vmul.f32 %v1041, 1.442695
        %v1059 = vpow.pop %v1058
        %v1060 = vmul.f32 %v1042, 1.442695
        %v1061 = vpow.pop %v1060
        %v1062 = vmul.f32 %v1043, 1.442695
        %v1063 = vpow.pop %v1062
        %v1064 = vmul.f32 %v1044, 1.442695
        %v1065 = vpow.pop %v1064
        %v1066 = vmul.f32 %v1045, 1.442695
        %v1067 = vpow.pop %v1066
        %v1068 = vmul.f32 %v1046, 1.442695
        %v1069 = vpow.pop %v1068
        %v1070 = vmul.f32 %v1047, 1.442695
        %v1071 = vpow.pop %v1070
        %v1072 = vmul.f32 %v1048, 1.442695
        %v1073 = vpow.pop %v1072
        %v1074 = vmul.f32 %v1049, 1.442695
        %v1075 = vpow.pop %v1074
        %v1076 = vmul.f32 %v1050, 1.442695
        %v1077 = vpow.pop %v1076
        %v1078 = vmul.f32 %v1051, 1.442695
        %v1079 = vpow.pop %v1078
        %v1080 = vmul.f32 %v1052, 1.442695
        %v1081 = vpow.pop %v1080
        %v1082 = vmul.f32 %v1053, 1.442695
        %v1083 = vpow.pop %v1082
        %v1084 = vmul.f32 %v1054, 1.442695
        %v1085 = vpow.pop %v1084
        %v1086 = vmul.f32 %v1055, 1.442695
        %v1087 = vpow.pop %v1086
        %1088 = vadd.xlane.f32.xlu0 %v1057
        %v1089 = vpop.xlane.xlu0 %1088
        %1090 = vadd.xlane.f32.xlu0 %v1059
        %v1091 = vpop.xlane.xlu0 %1090
        %1092 = vadd.xlane.f32.xlu0 %v1061
        %v1093 = vpop.xlane.xlu0 %1092
        %1094 = vadd.xlane.f32.xlu0 %v1063
        %v1095 = vpop.xlane.xlu0 %1094
        %1096 = vadd.xlane.f32.xlu0 %v1065
        %v1097 = vpop.xlane.xlu0 %1096
        %1098 = vadd.xlane.f32.xlu0 %v1067
        %v1099 = vpop.xlane.xlu0 %1098
        %1100 = vadd.xlane.f32.xlu0 %v1069
        %v1101 = vpop.xlane.xlu0 %1100
        %1102 = vadd.xlane.f32.xlu0 %v1071
        %v1103 = vpop.xlane.xlu0 %1102
        %1104 = vadd.xlane.f32.xlu0 %v1073
        %v1105 = vpop.xlane.xlu0 %1104
        %1106 = vadd.xlane.f32.xlu0 %v1075
        %v1107 = vpop.xlane.xlu0 %1106
        %1108 = vadd.xlane.f32.xlu0 %v1077
        %v1109 = vpop.xlane.xlu0 %1108
        %1110 = vadd.xlane.f32.xlu0 %v1079
        %v1111 = vpop.xlane.xlu0 %1110
        %1112 = vadd.xlane.f32.xlu0 %v1081
        %v1113 = vpop.xlane.xlu0 %1112
        %1114 = vadd.xlane.f32.xlu0 %v1083
        %v1115 = vpop.xlane.xlu0 %1114
        %1116 = vadd.xlane.f32.xlu0 %v1085
        %v1117 = vpop.xlane.xlu0 %1116
        %1118 = vadd.xlane.f32.xlu0 %v1087
        %v1119 = vpop.xlane.xlu0 %1118
        %v1120 = vrcp.pop %v1089
        %v1121 = vrcp.pop %v1091
        %v1122 = vrcp.pop %v1093
        %v1123 = vrcp.pop %v1095
        %v1124 = vrcp.pop %v1097
        %v1125 = vrcp.pop %v1099
        %v1126 = vrcp.pop %v1101
        %v1127 = vrcp.pop %v1103
        %v1128 = vrcp.pop %v1105
        %v1129 = vrcp.pop %v1107
        %v1130 = vrcp.pop %v1109
        %v1131 = vrcp.pop %v1111
        %v1132 = vrcp.pop %v1113
        %v1133 = vrcp.pop %v1115
        %v1134 = vrcp.pop %v1117
        %v1135 = vrcp.pop %v1119
        %v1136 = vmul.f32 %v1057, %v1120
        %v1137 = vmul.f32 %v1059, %v1121
        %v1138 = vmul.f32 %v1061, %v1122
        %v1139 = vmul.f32 %v1063, %v1123
        %v1140 = vmul.f32 %v1065, %v1124
        %v1141 = vmul.f32 %v1067, %v1125
        %v1142 = vmul.f32 %v1069, %v1126
        %v1143 = vmul.f32 %v1071, %v1127
        %v1144 = vmul.f32 %v1073, %v1128
        %v1145 = vmul.f32 %v1075, %v1129
        %v1146 = vmul.f32 %v1077, %v1130
        %v1147 = vmul.f32 %v1079, %v1131
        %v1148 = vmul.f32 %v1081, %v1132
        %v1149 = vmul.f32 %v1083, %v1133
        %v1150 = vmul.f32 %v1085, %v1134
        %v1151 = vmul.f32 %v1087, %v1135
        %v1153 = vperm.slane %v519, 0
        %v1155 = vmul.f32 %v1136, %v1153
        %v1156 = vmul.f32 %v1137, %v1153
        %v1157 = vmul.f32 %v1138, %v1153
        %v1158 = vmul.f32 %v1139, %v1153
        %v1159 = vmul.f32 %v1140, %v1153
        %v1160 = vmul.f32 %v1141, %v1153
        %v1161 = vmul.f32 %v1142, %v1153
        %v1162 = vmul.f32 %v1143, %v1153
        %v1163 = vmul.f32 %v1144, %v1153
        %v1164 = vmul.f32 %v1145, %v1153
        %v1165 = vmul.f32 %v1146, %v1153
        %v1166 = vmul.f32 %v1147, %v1153
        %v1167 = vmul.f32 %v1148, %v1153
        %v1168 = vmul.f32 %v1149, %v1153
        %v1169 = vmul.f32 %v1150, %v1153
        %v1170 = vmul.f32 %v1151, %v1153
        %v1171 = vpack.c.bf16 %v880, %v878
        %v1172 = vpack.c.bf16 %v1156, %v1155
        %v1173 = vpack.c.bf16 %v1158, %v1157
        %v1174 = vpack.c.bf16 %v1160, %v1159
        %v1175 = vpack.c.bf16 %v1162, %v1161
        %v1176 = vpack.c.bf16 %v1164, %v1163
        %v1177 = vpack.c.bf16 %v1166, %v1165
        %v1178 = vpack.c.bf16 %v1168, %v1167
        %v1179 = vpack.c.bf16 %v1170, %v1169
        %1180 = vmatpush.bf16.xpose.msra.mxu0 %v1179
        %1181 = vmatpush.bf16.xpose.msra.mxu0 %v1178
        %1182 = vmatpush.bf16.xpose.msra.mxu0 %v1177
        %1183 = vmatpush.bf16.xpose.msra.mxu0 %v1176
        %1184 = vmatpush.bf16.xpose.msra.mxu0 %v1175
        %1185 = vmatpush.bf16.xpose.msra.mxu0 %v1174
        %1186 = vmatpush.bf16.xpose.msra.mxu0 %v1173
        %1187 = vmatpush.bf16.xpose.msra.mxu0 %v1172
        %1188 = vmatmul.bf16.gmra.mxu0 %v1171
        %v1189 = vpop.f32.mrf.mxu0
        %v1190 = vadd.f32 0.0, %v1189
        %v1191 = vpop.f32.mrf.mxu0
        %v1192 = vadd.f32 0.0, %v1191
        %1193 = vdwg.mxu0
        %v1194 = vld [vmem:[%s8] sm:$0xf]
        %v1195 = vld [vmem:[%s8 + $0x4] sm:$0xf]
        %v1196 = vld [vmem:[%s8 + $0x8] sm:$0xf]
        %v1197 = vld [vmem:[%s8 + $0xc] sm:$0xf]
        %v1198 = vmax.f32 %v1190, 0.0
        %v1199 = vmax.f32 %v1192, 0.0
        %v1200 = vpack.c.bf16 %v1199, %v1198
        %v1201 = vld [vmem:[%s9] sm:$0xff]
        %v1202 = vld [vmem:[%s9 + $0x8] sm:$0xff]
        %v1203 = vld [vmem:[%s9 + $0x10] sm:$0xff]
        %v1204 = vld [vmem:[%s9 + $0x18] sm:$0xff]
        %1206 = vset.pattern.permute.xlu0 0
        %1207 = vperm.xlu0 %1206, %v1201
        %v1208 = vpop.permute.xlu0 %1207
        %1211 = vset.pattern.permute.xlu0 0
        %1212 = vperm.xlu0 %1211, %v1202
        %v1213 = vpop.permute.xlu0 %1212
        %1216 = vset.pattern.permute.xlu0 0
        %1217 = vperm.xlu0 %1216, %v1203
        %v1218 = vpop.permute.xlu0 %1217
        %1221 = vset.pattern.permute.xlu0 0
        %1222 = vperm.xlu0 %1221, %v1204
        %v1223 = vpop.permute.xlu0 %1222
        %v1229 = vunpack.c.l.b16 %v1194
        %v1230 = vunpack.c.l.b16 %v1195
        %v1231 = vunpack.c.l.b16 %v1196
        %v1232 = vunpack.c.l.b16 %v1197
        %v1233 = vpack.c.b16 %v1230, %v1229
        %v1234 = vpack.c.b16 %v1232, %v1231
        %v1236 = vsel %vm564, %v1233, 0
        %v1239 = vsel %vm564, %v1234, 0
        %1241 = vmatpush.bf16.msra.mxu0 0
        %1242 = vmatpush.bf16.msra.mxu0 0
        %1243 = vmatpush.bf16.msra.mxu0 0
        %1244 = vmatpush.bf16.msra.mxu0 0
        %1245 = vmatpush.bf16.msra.mxu0 0
        %1246 = vmatpush.bf16.msra.mxu0 0
        %1247 = vmatpush.bf16.msra.mxu0 0
        %1248 = vmatpush.bf16.msra.mxu0 %v1200
        %1249 = vmatmul.bf16.gmra.mxu0 %v1236
        %v1250 = vpop.f32.mrf.mxu0
        %v1251 = vadd.f32 %v1208, %v1250
        %v1252 = vpop.f32.mrf.mxu0
        %v1253 = vadd.f32 %v1213, %v1252
        %1254 = vmatmul.bf16.gmra.mxu0 %v1239
        %v1255 = vpop.f32.mrf.mxu0
        %v1256 = vadd.f32 %v1218, %v1255
        %v1257 = vpop.f32.mrf.mxu0
        %v1258 = vadd.f32 %v1223, %v1257
        %1259 = vdwg.mxu0
        %v1260 = vmul.f32 %v1251, %v1153
        %v1261 = vmul.f32 %v1253, %v1153
        %v1262 = vmul.f32 %v1256, %v1153
        %v1263 = vmul.f32 %v1258, %v1153
        %v1264 = vadd.f32 %v1260, %v698
        %v1265 = vadd.f32 %v1261, %v699
        %v1266 = vadd.f32 %v1262, %v700
        %v1267 = vadd.f32 %v1263, %v701
        %v1268 = vld [vmem:[%s10] sm:$0xf]
        %v1269 = vld [vmem:[%s10 + $0x4] sm:$0xf]
        %v1270 = vld [vmem:[%s10 + $0x8] sm:$0xf]
        %v1271 = vld [vmem:[%s10 + $0xc] sm:$0xf]
        %v1272 = vpack.c.bf16 %v1265, %v1264
        %v1273 = vpack.c.bf16 %v1267, %v1266
        %v1278 = vunpack.c.l.b16 %v1268
        %v1279 = vunpack.c.l.b16 %v1269
        %v1280 = vunpack.c.l.b16 %v1270
        %v1281 = vunpack.c.l.b16 %v1271
        %v1282 = vpack.c.b16 %v1279, %v1278
        %v1283 = vpack.c.b16 %v1281, %v1280
        %v1285 = vsel %vm848, %v1282, 0
        %v1288 = vsel %vm848, %v1283, 0
        %1290 = vmatpush.bf16.msra.mxu0 0
        %1291 = vmatpush.bf16.msra.mxu0 0
        %1292 = vmatpush.bf16.msra.mxu0 0
        %1293 = vmatpush.bf16.msra.mxu0 0
        %1294 = vmatpush.bf16.msra.mxu0 0
        %1295 = vmatpush.bf16.msra.mxu0 0
        %1296 = vmatpush.bf16.msra.mxu0 %v1273
        %1297 = vmatpush.bf16.msra.mxu0 %v1272
        %1298 = vmatmul.bf16.gmra.mxu0 %v1285
        %v1299 = vpop.f32.mrf.mxu0
        %v1300 = vadd.f32 0.0, %v1299
        %v1301 = vpop.f32.mrf.mxu0
        %v1302 = vadd.f32 0.0, %v1301
        %1303 = vmatmul.bf16.gmra.mxu0 %v1288
        %v1304 = vpop.f32.mrf.mxu0
        %v1305 = vadd.f32 0.0, %v1304
        %v1306 = vpop.f32.mrf.mxu0
        %v1307 = vadd.f32 0.0, %v1306
        %1308 = vdwg.mxu0
        %v1309 = vadd.f32 %v581, %v1300
        %v1310 = vadd.f32 %v583, %v1302
        %v1311 = vadd.f32 %v586, %v1305
        %v1312 = vadd.f32 %v588, %v1307
        %v1313 = vld [vmem:[%s11] sm:$0xff]
        %v1314 = vld [vmem:[%s11 + $0x8] sm:$0xff]
        %v1315 = vld [vmem:[%s11 + $0x10] sm:$0xff]
        %v1316 = vld [vmem:[%s11 + $0x18] sm:$0xff]
        %1318 = vset.pattern.permute.xlu0 0
        %1319 = vperm.xlu0 %1318, %v1313
        %v1320 = vpop.permute.xlu0 %1319
        %1323 = vset.pattern.permute.xlu0 0
        %1324 = vperm.xlu0 %1323, %v1314
        %v1325 = vpop.permute.xlu0 %1324
        %1328 = vset.pattern.permute.xlu0 0
        %1329 = vperm.xlu0 %1328, %v1315
        %v1330 = vpop.permute.xlu0 %1329
        %1333 = vset.pattern.permute.xlu0 0
        %1334 = vperm.xlu0 %1333, %v1316
        %v1335 = vpop.permute.xlu0 %1334
        %v1337 = vadd.f32 %v1309, %v1320
        %v1338 = vadd.f32 %v1310, %v1325
        %v1339 = vadd.f32 %v1311, %v1330
        %v1340 = vadd.f32 %v1312, %v1335
        %v1341 = vmul.f32 %v1337, %v1153
        %v1342 = vmul.f32 %v1338, %v1153
        %v1343 = vmul.f32 %v1339, %v1153
        %v1344 = vmul.f32 %v1340, %v1153
        %1349 = vrot.lane.b32.xlu0 %v1341, 2
        %v1350 = vpop.permute.xlu0 %1349
        %1351 = vrot.lane.b32.xlu0 %v1342, 2
        %v1352 = vpop.permute.xlu0 %1351
        %1353 = vrot.lane.b32.xlu0 %v1343, 2
        %v1354 = vpop.permute.xlu0 %1353
        %1355 = vrot.lane.b32.xlu0 %v1344, 2
        %v1356 = vpop.permute.xlu0 %1355
        %vm1361 = vcmask 15360
        %v1362 = vsel %vm1361, 0.0, %v1350
        %v1363 = vsel %vm1361, 0.0, %v1352
        %v1364 = vsel %vm1361, 0.0, %v1354
        %v1365 = vsel %vm1361, 0.0, %v1356
        %1366 = vrot.lane.b32.xlu0 %v1341, 126
        %v1367 = vpop.permute.xlu0 %1366
        %1368 = vrot.lane.b32.xlu0 %v1342, 126
        %v1369 = vpop.permute.xlu0 %1368
        %1370 = vrot.lane.b32.xlu0 %v1343, 126
        %v1371 = vpop.permute.xlu0 %1370
        %1372 = vrot.lane.b32.xlu0 %v1344, 126
        %v1373 = vpop.permute.xlu0 %1372
        %vm1378 = vcmask 1031168
        %v1379 = vsel %vm1378, %v1367, 0.0
        %v1380 = vsel %vm1378, %v1369, 0.0
        %v1381 = vsel %vm1378, %v1371, 0.0
        %v1382 = vsel %vm1378, %v1373, 0.0
        %s1383 = scalar_lea.vmem %s4, 16
        %v1384 = vld [vmem:[%s1383] sm:$0xf]
        %v1385 = vld [vmem:[%s1383 + $0x4] sm:$0xf]
        %v1386 = vld [vmem:[%s1383 + $0x8] sm:$0xf]
        %v1387 = vld [vmem:[%s1383 + $0xc] sm:$0xf]
        %v1388 = vpack.c.bf16 %v1363, %v1362
        %v1389 = vpack.c.bf16 %v1365, %v1364
        %v1390 = vpack.c.bf16 %v1342, %v1341
        %v1391 = vpack.c.bf16 %v1344, %v1343
        %v1392 = vpack.c.bf16 %v1380, %v1379
        %v1393 = vpack.c.bf16 %v1382, %v1381
        %s1394 = scalar_lea.vmem %s5, 32
        %v1395 = vld [vmem:[%s1394] sm:$0xff]
        %v1396 = vld [vmem:[%s1394 + $0x8] sm:$0xff]
        %v1397 = vld [vmem:[%s1394 + $0x10] sm:$0xff]
        %v1398 = vld [vmem:[%s1394 + $0x18] sm:$0xff]
        %1400 = vset.pattern.permute.xlu0 0
        %1401 = vperm.xlu0 %1400, %v1395
        %v1402 = vpop.permute.xlu0 %1401
        %1405 = vset.pattern.permute.xlu0 0
        %1406 = vperm.xlu0 %1405, %v1396
        %v1407 = vpop.permute.xlu0 %1406
        %1410 = vset.pattern.permute.xlu0 0
        %1411 = vperm.xlu0 %1410, %v1397
        %v1412 = vpop.permute.xlu0 %1411
        %1415 = vset.pattern.permute.xlu0 0
        %1416 = vperm.xlu0 %1415, %v1398
        %v1417 = vpop.permute.xlu0 %1416
        %v1423 = vunpack.c.l.b16 %v1384
        %v1424 = vunpack.c.l.b16 %v1385
        %v1425 = vunpack.c.l.b16 %v1386
        %v1426 = vunpack.c.l.b16 %v1387
        %v1427 = vpack.c.b16 %v1424, %v1423
        %v1428 = vpack.c.b16 %v1426, %v1425
        %v1430 = vsel %vm672, %v1427, 0
        %v1433 = vsel %vm672, %v1428, 0
        %1435 = vmatpush.bf16.msra.mxu0 0
        %1436 = vmatpush.bf16.msra.mxu0 0
        %1437 = vmatpush.bf16.msra.mxu0 %v1393
        %1438 = vmatpush.bf16.msra.mxu0 %v1392
        %1439 = vmatpush.bf16.msra.mxu0 %v1391
        %1440 = vmatpush.bf16.msra.mxu0 %v1390
        %1441 = vmatpush.bf16.msra.mxu0 %v1389
        %1442 = vmatpush.bf16.msra.mxu0 %v1388
        %1443 = vmatmul.bf16.gmra.mxu0 %v1430
        %v1444 = vpop.f32.mrf.mxu0
        %v1445 = vadd.f32 %v1402, %v1444
        %v1446 = vpop.f32.mrf.mxu0
        %v1447 = vadd.f32 %v1407, %v1446
        %1448 = vmatmul.bf16.gmra.mxu0 %v1433
        %v1449 = vpop.f32.mrf.mxu0
        %v1450 = vadd.f32 %v1412, %v1449
        %v1451 = vpop.f32.mrf.mxu0
        %v1452 = vadd.f32 %v1417, %v1451
        %1453 = vdwg.mxu0
        %v1454 = vmax.f32 %v1445, 0.0
        %v1455 = vmax.f32 %v1447, 0.0
        %v1456 = vmax.f32 %v1450, 0.0
        %v1457 = vmax.f32 %v1452, 0.0
        %1458 = vadd.xlane.f32.xlu0 %v1454
        %v1459 = vpop.xlane.xlu0 %1458
        %1460 = vadd.xlane.f32.xlu0 %v1455
        %v1461 = vpop.xlane.xlu0 %1460
        %1462 = vadd.xlane.f32.xlu0 %v1456
        %v1463 = vpop.xlane.xlu0 %1462
        %1464 = vadd.xlane.f32.xlu0 %v1457
        %v1465 = vpop.xlane.xlu0 %1464
        %v1466 = vmul.f32 %v1459, %v716
        %v1467 = vmul.f32 %v1461, %v716
        %v1468 = vmul.f32 %v1463, %v716
        %v1469 = vmul.f32 %v1465, %v716
        %v1470 = vsub.f32 %v1454, %v1466
        %v1471 = vsub.f32 %v1455, %v1467
        %v1472 = vsub.f32 %v1456, %v1468
        %v1473 = vsub.f32 %v1457, %v1469
        %v1474 = vmul.f32 %v1470, %v1470
        %v1475 = vmul.f32 %v1471, %v1471
        %v1476 = vmul.f32 %v1472, %v1472
        %v1477 = vmul.f32 %v1473, %v1473
        %1478 = vadd.xlane.f32.xlu0 %v1474
        %v1479 = vpop.xlane.xlu0 %1478
        %1480 = vadd.xlane.f32.xlu0 %v1475
        %v1481 = vpop.xlane.xlu0 %1480
        %1482 = vadd.xlane.f32.xlu0 %v1476
        %v1483 = vpop.xlane.xlu0 %1482
        %1484 = vadd.xlane.f32.xlu0 %v1477
        %v1485 = vpop.xlane.xlu0 %1484
        %v1486 = vmul.f32 %v1479, %v716
        %v1487 = vmul.f32 %v1481, %v716
        %v1488 = vmul.f32 %v1483, %v716
        %v1489 = vmul.f32 %v1485, %v716
        %v1490 = vadd.f32 %v1486, 1e-05
        %v1491 = vadd.f32 %v1487, 1e-05
        %v1492 = vadd.f32 %v1488, 1e-05
        %v1493 = vadd.f32 %v1489, 1e-05
        %v1494 = vrsqrt.pop %v1490
        %v1495 = vmul.f32 %v1494, %v1490
        %v1496 = vmul.f32 %v1495, %v1494
        %v1497 = vmul.f32 0.5, %v1496
        %v1498 = vsub.f32 1.5, %v1497
        %v1499 = vmul.f32 %v1494, %v1498
        %vm1500 = vweird.f32 %v1490
        %vm1501 = vweird.f32 %v1494
        %vm1502 = vmor %vm1500, %vm1501
        %v1503 = vsel %vm1502, %v1494, %v1499
        %v1504 = vrsqrt.pop %v1491
        %v1505 = vmul.f32 %v1504, %v1491
        %v1506 = vmul.f32 %v1505, %v1504
        %v1507 = vmul.f32 0.5, %v1506
        %v1508 = vsub.f32 1.5, %v1507
        %v1509 = vmul.f32 %v1504, %v1508
        %vm1510 = vweird.f32 %v1491
        %vm1511 = vweird.f32 %v1504
        %vm1512 = vmor %vm1510, %vm1511
        %v1513 = vsel %vm1512, %v1504, %v1509
        %v1514 = vrsqrt.pop %v1492
        %v1515 = vmul.f32 %v1514, %v1492
        %v1516 = vmul.f32 %v1515, %v1514
        %v1517 = vmul.f32 0.5, %v1516
        %v1518 = vsub.f32 1.5, %v1517
        %v1519 = vmul.f32 %v1514, %v1518
        %vm1520 = vweird.f32 %v1492
        %vm1521 = vweird.f32 %v1514
        %vm1522 = vmor %vm1520, %vm1521
        %v1523 = vsel %vm1522, %v1514, %v1519
        %v1524 = vrsqrt.pop %v1493
        %v1525 = vmul.f32 %v1524, %v1493
        %v1526 = vmul.f32 %v1525, %v1524
        %v1527 = vmul.f32 0.5, %v1526
        %v1528 = vsub.f32 1.5, %v1527
        %v1529 = vmul.f32 %v1524, %v1528
        %vm1530 = vweird.f32 %v1493
        %vm1531 = vweird.f32 %v1524
        %vm1532 = vmor %vm1530, %vm1531
        %v1533 = vsel %vm1532, %v1524, %v1529
        %v1534 = vmul.f32 %v1470, %v1503
        %v1535 = vmul.f32 %v1471, %v1513
        %v1536 = vmul.f32 %v1472, %v1523
        %v1537 = vmul.f32 %v1473, %v1533
        %s1538 = scalar_lea.vmem %s6, 24
        %v1539 = vld [vmem:[%s1538] sm:$0xf]
        %v1540 = vld [vmem:[%s1538 + $0x4] sm:$0xf]
        %v1541 = vld [vmem:[%s1538 + $0x8] sm:$0xf]
        %v1542 = vld [vmem:[%s1538 + $0xc] sm:$0xf]
        %v1543 = vld [vmem:[%s1538 + $0x10] sm:$0xf]
        %v1544 = vld [vmem:[%s1538 + $0x14] sm:$0xf]
        %v1545 = vpack.c.bf16 %v1535, %v1534
        %v1546 = vpack.c.bf16 %v1537, %v1536
        %s1547 = scalar_lea.vmem %s7, 48
        %v1548 = vld [vmem:[%s1547] sm:$0xff]
        %v1549 = vld [vmem:[%s1547 + $0x8] sm:$0xff]
        %v1550 = vld [vmem:[%s1547 + $0x10] sm:$0xff]
        %v1551 = vld [vmem:[%s1547 + $0x18] sm:$0xff]
        %v1552 = vld [vmem:[%s1547 + $0x20] sm:$0xff]
        %v1553 = vld [vmem:[%s1547 + $0x28] sm:$0xff]
        %1555 = vset.pattern.permute.xlu0 0
        %1556 = vperm.xlu0 %1555, %v1548
        %v1557 = vpop.permute.xlu0 %1556
        %1560 = vset.pattern.permute.xlu0 0
        %1561 = vperm.xlu0 %1560, %v1549
        %v1562 = vpop.permute.xlu0 %1561
        %1565 = vset.pattern.permute.xlu0 0
        %1566 = vperm.xlu0 %1565, %v1550
        %v1567 = vpop.permute.xlu0 %1566
        %1570 = vset.pattern.permute.xlu0 0
        %1571 = vperm.xlu0 %1570, %v1551
        %v1572 = vpop.permute.xlu0 %1571
        %1575 = vset.pattern.permute.xlu0 0
        %1576 = vperm.xlu0 %1575, %v1552
        %v1577 = vpop.permute.xlu0 %1576
        %1580 = vset.pattern.permute.xlu0 0
        %1581 = vperm.xlu0 %1580, %v1553
        %v1582 = vpop.permute.xlu0 %1581
        %v1590 = vunpack.c.l.b16 %v1539
        %v1591 = vunpack.c.l.b16 %v1540
        %v1592 = vunpack.c.l.b16 %v1541
        %v1593 = vunpack.c.l.b16 %v1542
        %v1594 = vunpack.c.l.b16 %v1543
        %v1595 = vunpack.c.l.b16 %v1544
        %v1596 = vpack.c.b16 %v1591, %v1590
        %v1597 = vpack.c.b16 %v1593, %v1592
        %v1598 = vpack.c.b16 %v1595, %v1594
        %v1600 = vsel %vm848, %v1596, 0
        %v1603 = vsel %vm848, %v1597, 0
        %v1606 = vsel %vm848, %v1598, 0
        %1608 = vmatpush.bf16.msra.mxu0 0
        %1609 = vmatpush.bf16.msra.mxu0 0
        %1610 = vmatpush.bf16.msra.mxu0 0
        %1611 = vmatpush.bf16.msra.mxu0 0
        %1612 = vmatpush.bf16.msra.mxu0 0
        %1613 = vmatpush.bf16.msra.mxu0 0
        %1614 = vmatpush.bf16.msra.mxu0 %v1546
        %1615 = vmatpush.bf16.msra.mxu0 %v1545
        %1616 = vmatmul.bf16.gmra.mxu0 %v1600
        %v1617 = vpop.f32.mrf.mxu0
        %v1618 = vadd.f32 %v1557, %v1617
        %v1619 = vpop.f32.mrf.mxu0
        %v1620 = vadd.f32 %v1562, %v1619
        %1621 = vmatmul.bf16.gmra.mxu0 %v1603
        %v1622 = vpop.f32.mrf.mxu0
        %v1623 = vadd.f32 %v1567, %v1622
        %v1624 = vpop.f32.mrf.mxu0
        %v1625 = vadd.f32 %v1572, %v1624
        %1626 = vmatmul.bf16.gmra.mxu0 %v1606
        %v1627 = vpop.f32.mrf.mxu0
        %v1628 = vadd.f32 %v1577, %v1627
        %v1629 = vpop.f32.mrf.mxu0
        %v1630 = vadd.f32 %v1582, %v1629
        %1631 = vdwg.mxu0
        %v1632 = vpack.c.bf16 %v1620, %v1618
        %v1633 = vpack.c.bf16 %v1625, %v1623
        %1634 = vxpose.xlu0.c.b16.start [1/8] %v1632, 128
        %1635 = vxpose.xlu0.c.b16.cont [2/8] 0, 128
        %1636 = vxpose.xlu0.c.b16.cont [3/8] 0, 128
        %1637 = vxpose.xlu0.c.b16.cont [4/8] 0, 128
        %1638 = vxpose.xlu0.c.b16.cont [5/8] 0, 128
        %1639 = vxpose.xlu0.c.b16.cont [6/8] 0, 128
        %1640 = vxpose.xlu0.c.b16.cont [7/8] 0, 128
        %1641 = vxpose.xlu0.c.b16.end [8/8] 0, 128
        %v1642 = vpop.trf.xlu0
        %v1643 = vpop.trf.xlu0
        %v1644 = vpop.trf.xlu0
        %v1645 = vpop.trf.xlu0
        %v1646 = vpop.trf.xlu0
        %v1647 = vpop.trf.xlu0
        %v1648 = vpop.trf.xlu0
        %v1649 = vpop.trf.xlu0
        %v1651 = vsel %vm564, %v1642, 0
        %v1654 = vsel %vm564, %v1643, 0
        %v1657 = vsel %vm564, %v1644, 0
        %v1660 = vsel %vm564, %v1645, 0
        %v1663 = vsel %vm564, %v1646, 0
        %v1666 = vsel %vm564, %v1647, 0
        %v1669 = vsel %vm564, %v1648, 0
        %v1672 = vsel %vm564, %v1649, 0
        %1674 = vmatpush.bf16.msra.mxu0 0
        %1675 = vmatpush.bf16.msra.mxu0 0
        %1676 = vmatpush.bf16.msra.mxu0 0
        %1677 = vmatpush.bf16.msra.mxu0 0
        %1678 = vmatpush.bf16.msra.mxu0 0
        %1679 = vmatpush.bf16.msra.mxu0 0
        %1680 = vmatpush.bf16.msra.mxu0 0
        %1681 = vmatpush.bf16.msra.mxu0 %v1633
        %1682 = vmatmul.bf16.gmra.mxu0 %v1651
        %v1683 = vpop.f32.mrf.mxu0
        %v1684 = vadd.f32 0.0, %v1683
        %v1685 = vpop.f32.mrf.mxu0
        %v1686 = vadd.f32 0.0, %v1685
        %1687 = vmatmul.bf16.gmra.mxu0 %v1654
        %v1688 = vpop.f32.mrf.mxu0
        %v1689 = vadd.f32 0.0, %v1688
        %v1690 = vpop.f32.mrf.mxu0
        %v1691 = vadd.f32 0.0, %v1690
        %1692 = vmatmul.bf16.gmra.mxu0 %v1657
        %v1693 = vpop.f32.mrf.mxu0
        %v1694 = vadd.f32 0.0, %v1693
        %v1695 = vpop.f32.mrf.mxu0
        %v1696 = vadd.f32 0.0, %v1695
        %1697 = vmatmul.bf16.gmra.mxu0 %v1660
        %v1698 = vpop.f32.mrf.mxu0
        %v1699 = vadd.f32 0.0, %v1698
        %v1700 = vpop.f32.mrf.mxu0
        %v1701 = vadd.f32 0.0, %v1700
        %1702 = vmatmul.bf16.gmra.mxu0 %v1663
        %v1703 = vpop.f32.mrf.mxu0
        %v1704 = vadd.f32 0.0, %v1703
        %v1705 = vpop.f32.mrf.mxu0
        %v1706 = vadd.f32 0.0, %v1705
        %1707 = vmatmul.bf16.gmra.mxu0 %v1666
        %v1708 = vpop.f32.mrf.mxu0
        %v1709 = vadd.f32 0.0, %v1708
        %v1710 = vpop.f32.mrf.mxu0
        %v1711 = vadd.f32 0.0, %v1710
        %1712 = vmatmul.bf16.gmra.mxu0 %v1669
        %v1713 = vpop.f32.mrf.mxu0
        %v1714 = vadd.f32 0.0, %v1713
        %v1715 = vpop.f32.mrf.mxu0
        %v1716 = vadd.f32 0.0, %v1715
        %1717 = vmatmul.bf16.gmra.mxu0 %v1672
        %v1718 = vpop.f32.mrf.mxu0
        %v1719 = vadd.f32 0.0, %v1718
        %v1720 = vpop.f32.mrf.mxu0
        %v1721 = vadd.f32 0.0, %v1720
        %1722 = vdwg.mxu0
        %v1723 = vmul.f32 %v1684, 0.25
        %v1724 = vmul.f32 %v1686, 0.25
        %v1725 = vmul.f32 %v1689, 0.25
        %v1726 = vmul.f32 %v1691, 0.25
        %v1727 = vmul.f32 %v1694, 0.25
        %v1728 = vmul.f32 %v1696, 0.25
        %v1729 = vmul.f32 %v1699, 0.25
        %v1730 = vmul.f32 %v1701, 0.25
        %v1731 = vmul.f32 %v1704, 0.25
        %v1732 = vmul.f32 %v1706, 0.25
        %v1733 = vmul.f32 %v1709, 0.25
        %v1734 = vmul.f32 %v1711, 0.25
        %v1735 = vmul.f32 %v1714, 0.25
        %v1736 = vmul.f32 %v1716, 0.25
        %v1737 = vmul.f32 %v1719, 0.25
        %v1738 = vmul.f32 %v1721, 0.25
        %v1739 = vadd.f32 %v1723, %v990
        %v1740 = vadd.f32 %v1724, %v990
        %v1741 = vadd.f32 %v1725, %v990
        %v1742 = vadd.f32 %v1726, %v990
        %v1743 = vadd.f32 %v1727, %v990
        %v1744 = vadd.f32 %v1728, %v990
        %v1745 = vadd.f32 %v1729, %v990
        %v1746 = vadd.f32 %v1730, %v990
        %v1747 = vadd.f32 %v1731, %v990
        %v1748 = vadd.f32 %v1732, %v990
        %v1749 = vadd.f32 %v1733, %v990
        %v1750 = vadd.f32 %v1734, %v990
        %v1751 = vadd.f32 %v1735, %v990
        %v1752 = vadd.f32 %v1736, %v990
        %v1753 = vadd.f32 %v1737, %v990
        %v1754 = vadd.f32 %v1738, %v990
        %1755 = vmax.xlane.f32.xlu0 %v1739
        %v1756 = vpop.xlane.xlu0 %1755
        %1757 = vmax.xlane.f32.xlu0 %v1740
        %v1758 = vpop.xlane.xlu0 %1757
        %1759 = vmax.xlane.f32.xlu0 %v1741
        %v1760 = vpop.xlane.xlu0 %1759
        %1761 = vmax.xlane.f32.xlu0 %v1742
        %v1762 = vpop.xlane.xlu0 %1761
        %1763 = vmax.xlane.f32.xlu0 %v1743
        %v1764 = vpop.xlane.xlu0 %1763
        %1765 = vmax.xlane.f32.xlu0 %v1744
        %v1766 = vpop.xlane.xlu0 %1765
        %1767 = vmax.xlane.f32.xlu0 %v1745
        %v1768 = vpop.xlane.xlu0 %1767
        %1769 = vmax.xlane.f32.xlu0 %v1746
        %v1770 = vpop.xlane.xlu0 %1769
        %1771 = vmax.xlane.f32.xlu0 %v1747
        %v1772 = vpop.xlane.xlu0 %1771
        %1773 = vmax.xlane.f32.xlu0 %v1748
        %v1774 = vpop.xlane.xlu0 %1773
        %1775 = vmax.xlane.f32.xlu0 %v1749
        %v1776 = vpop.xlane.xlu0 %1775
        %1777 = vmax.xlane.f32.xlu0 %v1750
        %v1778 = vpop.xlane.xlu0 %1777
        %1779 = vmax.xlane.f32.xlu0 %v1751
        %v1780 = vpop.xlane.xlu0 %1779
        %1781 = vmax.xlane.f32.xlu0 %v1752
        %v1782 = vpop.xlane.xlu0 %1781
        %1783 = vmax.xlane.f32.xlu0 %v1753
        %v1784 = vpop.xlane.xlu0 %1783
        %1785 = vmax.xlane.f32.xlu0 %v1754
        %v1786 = vpop.xlane.xlu0 %1785
        %v1787 = vsub.f32 %v1739, %v1756
        %v1788 = vsub.f32 %v1740, %v1758
        %v1789 = vsub.f32 %v1741, %v1760
        %v1790 = vsub.f32 %v1742, %v1762
        %v1791 = vsub.f32 %v1743, %v1764
        %v1792 = vsub.f32 %v1744, %v1766
        %v1793 = vsub.f32 %v1745, %v1768
        %v1794 = vsub.f32 %v1746, %v1770
        %v1795 = vsub.f32 %v1747, %v1772
        %v1796 = vsub.f32 %v1748, %v1774
        %v1797 = vsub.f32 %v1749, %v1776
        %v1798 = vsub.f32 %v1750, %v1778
        %v1799 = vsub.f32 %v1751, %v1780
        %v1800 = vsub.f32 %v1752, %v1782
        %v1801 = vsub.f32 %v1753, %v1784
        %v1802 = vsub.f32 %v1754, %v1786
        %v1803 = vmul.f32 %v1787, 1.442695
        %v1804 = vpow.pop %v1803
        %v1805 = vmul.f32 %v1788, 1.442695
        %v1806 = vpow.pop %v1805
        %v1807 = vmul.f32 %v1789, 1.442695
        %v1808 = vpow.pop %v1807
        %v1809 = vmul.f32 %v1790, 1.442695
        %v1810 = vpow.pop %v1809
        %v1811 = vmul.f32 %v1791, 1.442695
        %v1812 = vpow.pop %v1811
        %v1813 = vmul.f32 %v1792, 1.442695
        %v1814 = vpow.pop %v1813
        %v1815 = vmul.f32 %v1793, 1.442695
        %v1816 = vpow.pop %v1815
        %v1817 = vmul.f32 %v1794, 1.442695
        %v1818 = vpow.pop %v1817
        %v1819 = vmul.f32 %v1795, 1.442695
        %v1820 = vpow.pop %v1819
        %v1821 = vmul.f32 %v1796, 1.442695
        %v1822 = vpow.pop %v1821
        %v1823 = vmul.f32 %v1797, 1.442695
        %v1824 = vpow.pop %v1823
        %v1825 = vmul.f32 %v1798, 1.442695
        %v1826 = vpow.pop %v1825
        %v1827 = vmul.f32 %v1799, 1.442695
        %v1828 = vpow.pop %v1827
        %v1829 = vmul.f32 %v1800, 1.442695
        %v1830 = vpow.pop %v1829
        %v1831 = vmul.f32 %v1801, 1.442695
        %v1832 = vpow.pop %v1831
        %v1833 = vmul.f32 %v1802, 1.442695
        %v1834 = vpow.pop %v1833
        %1835 = vadd.xlane.f32.xlu0 %v1804
        %v1836 = vpop.xlane.xlu0 %1835
        %1837 = vadd.xlane.f32.xlu0 %v1806
        %v1838 = vpop.xlane.xlu0 %1837
        %1839 = vadd.xlane.f32.xlu0 %v1808
        %v1840 = vpop.xlane.xlu0 %1839
        %1841 = vadd.xlane.f32.xlu0 %v1810
        %v1842 = vpop.xlane.xlu0 %1841
        %1843 = vadd.xlane.f32.xlu0 %v1812
        %v1844 = vpop.xlane.xlu0 %1843
        %1845 = vadd.xlane.f32.xlu0 %v1814
        %v1846 = vpop.xlane.xlu0 %1845
        %1847 = vadd.xlane.f32.xlu0 %v1816
        %v1848 = vpop.xlane.xlu0 %1847
        %1849 = vadd.xlane.f32.xlu0 %v1818
        %v1850 = vpop.xlane.xlu0 %1849
        %1851 = vadd.xlane.f32.xlu0 %v1820
        %v1852 = vpop.xlane.xlu0 %1851
        %1853 = vadd.xlane.f32.xlu0 %v1822
        %v1854 = vpop.xlane.xlu0 %1853
        %1855 = vadd.xlane.f32.xlu0 %v1824
        %v1856 = vpop.xlane.xlu0 %1855
        %1857 = vadd.xlane.f32.xlu0 %v1826
        %v1858 = vpop.xlane.xlu0 %1857
        %1859 = vadd.xlane.f32.xlu0 %v1828
        %v1860 = vpop.xlane.xlu0 %1859
        %1861 = vadd.xlane.f32.xlu0 %v1830
        %v1862 = vpop.xlane.xlu0 %1861
        %1863 = vadd.xlane.f32.xlu0 %v1832
        %v1864 = vpop.xlane.xlu0 %1863
        %1865 = vadd.xlane.f32.xlu0 %v1834
        %v1866 = vpop.xlane.xlu0 %1865
        %v1867 = vrcp.pop %v1836
        %v1868 = vrcp.pop %v1838
        %v1869 = vrcp.pop %v1840
        %v1870 = vrcp.pop %v1842
        %v1871 = vrcp.pop %v1844
        %v1872 = vrcp.pop %v1846
        %v1873 = vrcp.pop %v1848
        %v1874 = vrcp.pop %v1850
        %v1875 = vrcp.pop %v1852
        %v1876 = vrcp.pop %v1854
        %v1877 = vrcp.pop %v1856
        %v1878 = vrcp.pop %v1858
        %v1879 = vrcp.pop %v1860
        %v1880 = vrcp.pop %v1862
        %v1881 = vrcp.pop %v1864
        %v1882 = vrcp.pop %v1866
        %v1883 = vmul.f32 %v1804, %v1867
        %v1884 = vmul.f32 %v1806, %v1868
        %v1885 = vmul.f32 %v1808, %v1869
        %v1886 = vmul.f32 %v1810, %v1870
        %v1887 = vmul.f32 %v1812, %v1871
        %v1888 = vmul.f32 %v1814, %v1872
        %v1889 = vmul.f32 %v1816, %v1873
        %v1890 = vmul.f32 %v1818, %v1874
        %v1891 = vmul.f32 %v1820, %v1875
        %v1892 = vmul.f32 %v1822, %v1876
        %v1893 = vmul.f32 %v1824, %v1877
        %v1894 = vmul.f32 %v1826, %v1878
        %v1895 = vmul.f32 %v1828, %v1879
        %v1896 = vmul.f32 %v1830, %v1880
        %v1897 = vmul.f32 %v1832, %v1881
        %v1898 = vmul.f32 %v1834, %v1882
        %v1899 = vmul.f32 %v1883, %v1153
        %v1900 = vmul.f32 %v1884, %v1153
        %v1901 = vmul.f32 %v1885, %v1153
        %v1902 = vmul.f32 %v1886, %v1153
        %v1903 = vmul.f32 %v1887, %v1153
        %v1904 = vmul.f32 %v1888, %v1153
        %v1905 = vmul.f32 %v1889, %v1153
        %v1906 = vmul.f32 %v1890, %v1153
        %v1907 = vmul.f32 %v1891, %v1153
        %v1908 = vmul.f32 %v1892, %v1153
        %v1909 = vmul.f32 %v1893, %v1153
        %v1910 = vmul.f32 %v1894, %v1153
        %v1911 = vmul.f32 %v1895, %v1153
        %v1912 = vmul.f32 %v1896, %v1153
        %v1913 = vmul.f32 %v1897, %v1153
        %v1914 = vmul.f32 %v1898, %v1153
        %v1915 = vpack.c.bf16 %v1630, %v1628
        %v1916 = vpack.c.bf16 %v1900, %v1899
        %v1917 = vpack.c.bf16 %v1902, %v1901
        %v1918 = vpack.c.bf16 %v1904, %v1903
        %v1919 = vpack.c.bf16 %v1906, %v1905
        %v1920 = vpack.c.bf16 %v1908, %v1907
        %v1921 = vpack.c.bf16 %v1910, %v1909
        %v1922 = vpack.c.bf16 %v1912, %v1911
        %v1923 = vpack.c.bf16 %v1914, %v1913
        %1924 = vmatpush.bf16.xpose.msra.mxu0 %v1923
        %1925 = vmatpush.bf16.xpose.msra.mxu0 %v1922
        %1926 = vmatpush.bf16.xpose.msra.mxu0 %v1921
        %1927 = vmatpush.bf16.xpose.msra.mxu0 %v1920
        %1928 = vmatpush.bf16.xpose.msra.mxu0 %v1919
        %1929 = vmatpush.bf16.xpose.msra.mxu0 %v1918
        %1930 = vmatpush.bf16.xpose.msra.mxu0 %v1917
        %1931 = vmatpush.bf16.xpose.msra.mxu0 %v1916
        %1932 = vmatmul.bf16.gmra.mxu0 %v1915
        %v1933 = vpop.f32.mrf.mxu0
        %v1934 = vadd.f32 0.0, %v1933
        %v1935 = vpop.f32.mrf.mxu0
        %v1936 = vadd.f32 0.0, %v1935
        %1937 = vdwg.mxu0
        %s1938 = scalar_lea.vmem %s8, 16
        %v1939 = vld [vmem:[%s1938] sm:$0xf]
        %v1940 = vld [vmem:[%s1938 + $0x4] sm:$0xf]
        %v1941 = vld [vmem:[%s1938 + $0x8] sm:$0xf]
        %v1942 = vld [vmem:[%s1938 + $0xc] sm:$0xf]
        %v1943 = vmax.f32 %v1934, 0.0
        %v1944 = vmax.f32 %v1936, 0.0
        %v1945 = vpack.c.bf16 %v1944, %v1943
        %s1946 = scalar_lea.vmem %s9, 32
        %v1947 = vld [vmem:[%s1946] sm:$0xff]
        %v1948 = vld [vmem:[%s1946 + $0x8] sm:$0xff]
        %v1949 = vld [vmem:[%s1946 + $0x10] sm:$0xff]
        %v1950 = vld [vmem:[%s1946 + $0x18] sm:$0xff]
        %1952 = vset.pattern.permute.xlu0 0
        %1953 = vperm.xlu0 %1952, %v1947
        %v1954 = vpop.permute.xlu0 %1953
        %1957 = vset.pattern.permute.xlu0 0
        %1958 = vperm.xlu0 %1957, %v1948
        %v1959 = vpop.permute.xlu0 %1958
        %1962 = vset.pattern.permute.xlu0 0
        %1963 = vperm.xlu0 %1962, %v1949
        %v1964 = vpop.permute.xlu0 %1963
        %1967 = vset.pattern.permute.xlu0 0
        %1968 = vperm.xlu0 %1967, %v1950
        %v1969 = vpop.permute.xlu0 %1968
        %v1975 = vunpack.c.l.b16 %v1939
        %v1976 = vunpack.c.l.b16 %v1940
        %v1977 = vunpack.c.l.b16 %v1941
        %v1978 = vunpack.c.l.b16 %v1942
        %v1979 = vpack.c.b16 %v1976, %v1975
        %v1980 = vpack.c.b16 %v1978, %v1977
        %v1982 = vsel %vm564, %v1979, 0
        %v1985 = vsel %vm564, %v1980, 0
        %1987 = vmatpush.bf16.msra.mxu0 0
        %1988 = vmatpush.bf16.msra.mxu0 0
        %1989 = vmatpush.bf16.msra.mxu0 0
        %1990 = vmatpush.bf16.msra.mxu0 0
        %1991 = vmatpush.bf16.msra.mxu0 0
        %1992 = vmatpush.bf16.msra.mxu0 0
        %1993 = vmatpush.bf16.msra.mxu0 0
        %1994 = vmatpush.bf16.msra.mxu0 %v1945
        %1995 = vmatmul.bf16.gmra.mxu0 %v1982
        %v1996 = vpop.f32.mrf.mxu0
        %v1997 = vadd.f32 %v1954, %v1996
        %v1998 = vpop.f32.mrf.mxu0
        %v1999 = vadd.f32 %v1959, %v1998
        %2000 = vmatmul.bf16.gmra.mxu0 %v1985
        %v2001 = vpop.f32.mrf.mxu0
        %v2002 = vadd.f32 %v1964, %v2001
        %v2003 = vpop.f32.mrf.mxu0
        %v2004 = vadd.f32 %v1969, %v2003
        %2005 = vdwg.mxu0
        %v2006 = vmul.f32 %v1997, %v1153
        %v2007 = vmul.f32 %v1999, %v1153
        %v2008 = vmul.f32 %v2002, %v1153
        %v2009 = vmul.f32 %v2004, %v1153
        %v2010 = vadd.f32 %v2006, %v1454
        %v2011 = vadd.f32 %v2007, %v1455
        %v2012 = vadd.f32 %v2008, %v1456
        %v2013 = vadd.f32 %v2009, %v1457
        %s2014 = scalar_lea.vmem %s10, 16
        %v2015 = vld [vmem:[%s2014] sm:$0xf]
        %v2016 = vld [vmem:[%s2014 + $0x4] sm:$0xf]
        %v2017 = vld [vmem:[%s2014 + $0x8] sm:$0xf]
        %v2018 = vld [vmem:[%s2014 + $0xc] sm:$0xf]
        %v2019 = vpack.c.bf16 %v2011, %v2010
        %v2020 = vpack.c.bf16 %v2013, %v2012
        %v2025 = vunpack.c.l.b16 %v2015
        %v2026 = vunpack.c.l.b16 %v2016
        %v2027 = vunpack.c.l.b16 %v2017
        %v2028 = vunpack.c.l.b16 %v2018
        %v2029 = vpack.c.b16 %v2026, %v2025
        %v2030 = vpack.c.b16 %v2028, %v2027
        %v2032 = vsel %vm848, %v2029, 0
        %v2035 = vsel %vm848, %v2030, 0
        %2037 = vmatpush.bf16.msra.mxu0 0
        %2038 = vmatpush.bf16.msra.mxu0 0
        %2039 = vmatpush.bf16.msra.mxu0 0
        %2040 = vmatpush.bf16.msra.mxu0 0
        %2041 = vmatpush.bf16.msra.mxu0 0
        %2042 = vmatpush.bf16.msra.mxu0 0
        %2043 = vmatpush.bf16.msra.mxu0 %v2020
        %2044 = vmatpush.bf16.msra.mxu0 %v2019
        %2045 = vmatmul.bf16.gmra.mxu0 %v2032
        %v2046 = vpop.f32.mrf.mxu0
        %v2047 = vadd.f32 0.0, %v2046
        %v2048 = vpop.f32.mrf.mxu0
        %v2049 = vadd.f32 0.0, %v2048
        %2050 = vmatmul.bf16.gmra.mxu0 %v2035
        %v2051 = vpop.f32.mrf.mxu0
        %v2052 = vadd.f32 0.0, %v2051
        %v2053 = vpop.f32.mrf.mxu0
        %v2054 = vadd.f32 0.0, %v2053
        %2055 = vdwg.mxu0
        %v2056 = vadd.f32 %v1341, %v2047
        %v2057 = vadd.f32 %v1342, %v2049
        %v2058 = vadd.f32 %v1343, %v2052
        %v2059 = vadd.f32 %v1344, %v2054
        %s2060 = scalar_lea.vmem %s11, 32
        %v2061 = vld [vmem:[%s2060] sm:$0xff]
        %v2062 = vld [vmem:[%s2060 + $0x8] sm:$0xff]
        %v2063 = vld [vmem:[%s2060 + $0x10] sm:$0xff]
        %v2064 = vld [vmem:[%s2060 + $0x18] sm:$0xff]
        %2066 = vset.pattern.permute.xlu0 0
        %2067 = vperm.xlu0 %2066, %v2061
        %v2068 = vpop.permute.xlu0 %2067
        %2071 = vset.pattern.permute.xlu0 0
        %2072 = vperm.xlu0 %2071, %v2062
        %v2073 = vpop.permute.xlu0 %2072
        %2076 = vset.pattern.permute.xlu0 0
        %2077 = vperm.xlu0 %2076, %v2063
        %v2078 = vpop.permute.xlu0 %2077
        %2081 = vset.pattern.permute.xlu0 0
        %2082 = vperm.xlu0 %2081, %v2064
        %v2083 = vpop.permute.xlu0 %2082
        %v2085 = vadd.f32 %v2056, %v2068
        %v2086 = vadd.f32 %v2057, %v2073
        %v2087 = vadd.f32 %v2058, %v2078
        %v2088 = vadd.f32 %v2059, %v2083
        %v2089 = vmul.f32 %v2085, %v1153
        %v2090 = vmul.f32 %v2086, %v1153
        %v2091 = vmul.f32 %v2087, %v1153
        %v2092 = vmul.f32 %v2088, %v1153
        %2093 = vst [vmem:[%s509] sm:$0xff] %v2089
        %2094 = vst [vmem:[%s509 + $0x8] sm:$0xff] %v2090
        %2095 = vst [vmem:[%s509 + $0x10] sm:$0xff] %v2091
        %2096 = vst [vmem:[%s509 + $0x18] sm:$0xff] %v2092
        %v2097 = vld [vmem:[%s12] sm:$0xf]
        %v2098 = vpack.c.bf16 %v2090, %v2089
        %v2099 = vpack.c.bf16 %v2092, %v2091
        %v2100 = vld [vmem:[%s13] sm:$0xff]
        %2102 = vset.pattern.permute.xlu0 0
        %2103 = vperm.xlu0 %2102, %v2100
        %v2104 = vpop.permute.xlu0 %2103
        %v2107 = vsel %vm848, %v2097, 0
        %2109 = vmatpush.bf16.msra.mxu0 0
        %2110 = vmatpush.bf16.msra.mxu0 0
        %2111 = vmatpush.bf16.msra.mxu0 0
        %2112 = vmatpush.bf16.msra.mxu0 0
        %2113 = vmatpush.bf16.msra.mxu0 0
        %2114 = vmatpush.bf16.msra.mxu0 0
        %2115 = vmatpush.bf16.msra.mxu0 %v2099
        %2116 = vmatpush.bf16.msra.mxu0 %v2098
        %2117 = vmatmul.bf16.gmra.mxu0 %v2107
        %v2118 = vpop.f32.mrf.mxu0
        %v2119 = vadd.f32 %v2104, %v2118
        %v2120 = vpop.f32.mrf.mxu0
        %2121 = vdwg.mxu0
        %v2122 = vmul.f32 %v2119, %v1153
        %2123 = vst [vmem:[%s502] sm:$0xff] %v2122
        %s2124 = sand.u32 %s345, 1
        %s2125 = scalar_lea.sflag [#allocation3], %s2124
        %s2126 = sand.u32 %s345, 1
        %s2127 = smul.addr %s2126, 8
        %s2128 = scalar_lea.vmem [#allocation2], %s2127
        %s2129 = sand.u32 %s371, 1
        %s2130 = scalar_lea.sflag [#allocation5], %s2129
        %s2131 = sand.u32 %s371, 1
        %s2132 = smul.addr %s2131, 32
        %s2133 = scalar_lea.vmem [#allocation4], %s2132
        // Predicated region
        $region77: #{tpu_custom_call.1} parent=75 // pred_check
          %p2134 = pneg %p355
        $region78: #{tpu_custom_call.1} parent=75 // pred_check_branch
          %2136 = sbr.rel (%p2134) target = $region80
        $region79: #{tpu_custom_call.1} parent=75 // pred_region
          %2138 = vsyncadd %s2125, 0
          %s2139 = smul.addr %s33, 8
          %s2140 = scalar_lea.hbm %s14, %s2139
          %s2142 = sshll.u32 %s2128, 4
          %s2143 = int_to_ptr.vmem [resolvable:$true] %s2142
          %s2144 = sshll.u32 %s2140, 4
          %s2145 = int_to_ptr.hbm [resolvable:$true] %s2144
          %2147 = dma.vmem_to_hbm [thread:$0]  %s2143, 128, %s2145, %s2125
        $region80: #{tpu_custom_call.1} parent=75 // pred_fallthru
          _
        // Predicated region
        $region81: #{tpu_custom_call.1} parent=75 // pred_check
          %p2148 = pneg %p381
        $region82: #{tpu_custom_call.1} parent=75 // pred_check_branch
          %2150 = sbr.rel (%p2148) target = $region84
        $region83: #{tpu_custom_call.1} parent=75 // pred_region
          %2152 = vsyncadd %s2130, 0
          %s2153 = smul.addr %s33, 4
          %s2154 = smul.addr %s2153, 8
          %s2155 = scalar_lea.hbm %s15, %s2154
          %s2156 = sshll.u32 %s2133, 4
          %s2157 = int_to_ptr.vmem [resolvable:$true] %s2156
          %s2158 = sshll.u32 %s2155, 4
          %s2159 = int_to_ptr.hbm [resolvable:$true] %s2158
          %2164 = dma.vmem_to_hbm [thread:$0]  %s2157, 512, %s2159, %s2130, 128, 128, 8
        $region84: #{tpu_custom_call.1} parent=75 // pred_fallthru
          _
      $region76: #{tpu_custom_call.1} parent=5 // pred_fallthru
        _
      %p2165 = scmp.le.s32.totalorder 2, %s28
      // Predicated region
      $region85: #{tpu_custom_call.1} parent=5 // pred_check
        %p2166 = pneg %p2165
      $region86: #{tpu_custom_call.1} parent=5 // pred_check_branch
        %2168 = sbr.rel (%p2166) target = $region88
      $region87: #{tpu_custom_call.1} parent=5 // pred_region
        %s2169 = ssub.s32 %s28, 2
        // Predicated region
        $region89: #{tpu_custom_call.1} parent=87 // pred_check
          %p2170 = pneg %p361
        $region90: #{tpu_custom_call.1} parent=87 // pred_check_branch
          %2172 = sbr.rel (%p2170) target = $region92
        $region91: #{tpu_custom_call.1} parent=87 // pred_region
          %s2173 = sand.u32 %s346, 1
          %s2174 = scalar_lea.sflag [#allocation3], %s2173
          %s2175 = sand.u32 %s346, 1
          %s2176 = smul.addr %s2175, 8
          %s2177 = scalar_lea.vmem [#allocation2], %s2176
          %2179 = dma.done %s2174, 128
        $region92: #{tpu_custom_call.1} parent=87 // pred_fallthru
          _
        // Predicated region
        $region93: #{tpu_custom_call.1} parent=87 // pred_check
          %p2180 = pneg %p387
        $region94: #{tpu_custom_call.1} parent=87 // pred_check_branch
          %2182 = sbr.rel (%p2180) target = $region96
        $region95: #{tpu_custom_call.1} parent=87 // pred_region
          %s2183 = sand.u32 %s372, 1
          %s2184 = scalar_lea.sflag [#allocation5], %s2183
          %s2185 = sand.u32 %s372, 1
          %s2186 = smul.addr %s2185, 32
          %s2187 = scalar_lea.vmem [#allocation4], %s2186
          %2189 = dma.done %s2184, 512
        $region96: #{tpu_custom_call.1} parent=87 // pred_fallthru
          _
      $region88: #{tpu_custom_call.1} parent=5 // pred_fallthru
        _
    $region6: #{tpu_custom_call.1} parent=1 // loop_footer
      %s32 = sadd.s32 1, %s28
    $region7: #{tpu_custom_call.1} parent=1 // loop_footer_branch
      %27 = sbr.rel target = $region3
    $region8: #{tpu_custom_call.1} parent=1 // loop_exit
      _
    %2190 = vsyncpa [#allocation3], 1
    %s2191 = scalar_lea.sflag [#allocation3], 1
    %2192 = vsyncpa %s2191, 1
    %2193 = vsyncpa [#allocation5], 1
    %s2194 = scalar_lea.sflag [#allocation5], 1
    %2195 = vsyncpa %s2194, 1

</llo_original>
